<compile_context>
chip_gen: v7x
topology: tpu7x:2x2x1
jax: 0.10.0
libtpu: 0.0.40
codegen_flags: <defaults>
</compile_context>

<pallas_src>
import functools

import jax
import jax.numpy as jnp
import numpy as np
from jax.experimental import pallas as pl
from jax.experimental.pallas import tpu as pltpu


def _spatial_attn_kernel(b_ref, x_ref, wm_ref, wa_ref, o_ref, *, C):
    # b_ref : SMEM (1,)        conv bias
    # x_ref : VMEM (TB, C, HW) input tile (lane-dense spatial axis)
    # wm_ref: VMEM (HW, HW)    conv-as-matmul matrix for the channel-max map
    # wa_ref: VMEM (HW, HW)    conv-as-matmul matrix for the channel-avg map
    # o_ref : VMEM (TB, HW)    output tile (lane-dense)
    x = x_ref[...]

    # ---- channel pooling: one whole-block reduce over the C axis -----------
    maxm = jnp.max(x, axis=1).astype(jnp.float32)                  # (TB, HW)
    avgm = jnp.sum(x.astype(jnp.float32), axis=1) * (1.0 / C)      # (TB, HW)

    # ---- 7x7 SAME conv as two MXU matmuls (padding baked into Wm/Wa) -------
    acc = jnp.dot(maxm, wm_ref[...],
                  preferred_element_type=jnp.float32,
                  precision=jax.lax.Precision.HIGHEST)
    acc = acc + jnp.dot(avgm, wa_ref[...],
                        preferred_element_type=jnp.float32,
                        precision=jax.lax.Precision.HIGHEST)
    acc = acc + b_ref[0]

    o_ref[...] = jax.nn.sigmoid(acc).astype(o_ref.dtype)


def _build_conv_matrices(weight, H, W, K):
    """Bake a 2->1 KxK SAME conv into two dense (HW, HW) f32 matrices.

    mat_c[src, dst] = weight[0, c, ki, kj] whenever output pixel `dst` reads
    source pixel `src` through tap (ki, kj).  Out-of-image taps (zero padding)
    simply get no entry, and cross-row column wrap cannot occur because the
    source/dest indices are computed in 2-D.
    """
    P = K // 2
    HW = H * W
    w = np.asarray(weight, dtype=np.float32).reshape(2, K, K)
    ii, jj = np.meshgrid(np.arange(H), np.arange(W), indexing="ij")
    dst = (ii * W + jj).ravel()
    mats = np.zeros((2, HW, HW), dtype=np.float32)
    for ki in range(K):
        for kj in range(K):
            si = (ii + ki - P).ravel()
            sj = (jj + kj - P).ravel()
            valid = (si >= 0) & (si < H) & (sj >= 0) & (sj < W)
            src = si[valid] * W + sj[valid]
            d = dst[valid]
            for c in range(2):
                mats[c, src, d] += w[c, ki, kj]
    return jnp.asarray(mats[0]), jnp.asarray(mats[1])


def spatial_attention(x, weight, bias, *, kernel_size=7):
    """x: [B, C, H, W], weight: [1, 2, K, K], bias: [1] -> [B, 1, H, W]."""
    B, C, H, W = x.shape
    K = kernel_size
    HW = H * W

    wm, wa = _build_conv_matrices(weight, H, W, K)
    b_flat = jnp.asarray(bias, jnp.float32).reshape(1)

    # Batch tiling: TB = B for small batches, otherwise pad B to a multiple
    # of 8 and process 8 images per grid step (bounded VMEM footprint).
    if B <= 8:
        TB, B_pad = B, B
    else:
        TB = 8
        B_pad = ((B + 7) // 8) * 8

    x_flat = x.reshape(B, C, HW)                 # lane-dense, no padded HBM copy
    if B_pad != B:
        x_flat = jnp.pad(x_flat, ((0, B_pad - B), (0, 0), (0, 0)))
    grid = (B_pad // TB,)

    # VMEM budget from actual block sizes (cap at v7x physical 64 MiB).
    elt = jnp.dtype(x.dtype).itemsize
    vmem_need = (2 * TB * C * HW * elt           # x tile, double-buffered
                 + 2 * HW * HW * 4               # two conv matrices
                 + 2 * TB * HW * elt             # output tile, double-buffered
                 + 8 * TB * HW * 4)              # f32 intermediates headroom
    vmem_limit = int(min(max(2 * vmem_need, 16 * 1024 * 1024),
                         64 * 1024 * 1024))

    kernel = functools.partial(_spatial_attn_kernel, C=C)

    out_flat = pl.pallas_call(
        kernel,
        out_shape=jax.ShapeDtypeStruct((B_pad, HW), x.dtype),
        grid=grid,
        in_specs=[
            pl.BlockSpec(memory_space=pltpu.MemorySpace.SMEM),   # conv bias
            pl.BlockSpec((TB, C, HW), lambda b: (b, 0, 0)),      # x tile
            pl.BlockSpec((HW, HW), lambda b: (0, 0)),            # Wm (resident)
            pl.BlockSpec((HW, HW), lambda b: (0, 0)),            # Wa (resident)
        ],
        out_specs=pl.BlockSpec((TB, HW), lambda b: (b, 0)),      # lane-dense out
        compiler_params=pltpu.CompilerParams(
            dimension_semantics=("parallel",),
            vmem_limit_bytes=vmem_limit,
        ),
    )(b_flat, x_flat, wm, wa)

    return out_flat[:B].reshape(B, 1, H, W)


def _reference(x, weight, bias):
    max_map = jnp.max(x, axis=1, keepdims=True)
    avg_map = jnp.mean(x, axis=1, keepdims=True)
    feat = jnp.concatenate([max_map, avg_map], axis=1)
    out = jax.lax.conv_general_dilated(
        feat, weight, window_strides=(1, 1), padding="SAME",
        dimension_numbers=("NCHW", "OIHW", "NCHW"),
        precision=jax.lax.Precision.HIGHEST)
    return jax.nn.sigmoid(out + bias.reshape(1, 1, 1, 1))


if __name__ == "__main__":
    key = jax.random.PRNGKey(0)
    kx, kw, kb = jax.random.split(key, 3)

    B, C, H, W = 2, 4, 16, 16
    K = 7

    x = jax.random.normal(kx, (B, C, H, W), dtype=jnp.float32)
    # Deterministic synthetic parameters (Conv2d(2, 1, 7, padding=3) shapes).
    weight = jax.random.normal(kw, (1, 2, K, K), dtype=jnp.float32) * 0.1
    bias = jax.random.normal(kb, (1,), dtype=jnp.float32) * 0.1

    out = spatial_attention(x, weight, bias, kernel_size=K)
    out = jax.block_until_ready(out)

    ref = jax.block_until_ready(_reference(x, weight, bias))
    np.testing.assert_allclose(np.asarray(out), np.asarray(ref),
                               rtol=1e-4, atol=1e-5)
    assert out.shape == (B, 1, H, W)

    print("KERNEL_OK")
</pallas_src>

<mosaic_0001>
module attributes {stable_mosaic.version = 11 : i64} {
  func.func @_spatial_attn_kernel(%arg0: i32, %arg1: memref<1xf32, #tpu.memory_space<smem>>, %arg2: memref<2x4x256xf32, #tpu.memory_space<vmem>>, %arg3: memref<256x256xf32, #tpu.memory_space<vmem>>, %arg4: memref<256x256xf32, #tpu.memory_space<vmem>>, %arg5: memref<2x256xf32, #tpu.memory_space<vmem>>) attributes {dimension_semantics = [#tpu.dimension_semantics<parallel>], iteration_bounds = array<i64: 1>, scalar_prefetch = 0 : i64, scratch_operands = 0 : i64, tpu.core_type = #tpu.core_type<tc>, window_params = [{transform_indices = @transform_0, window_bounds = array<i64: 1>}, {transform_indices = @transform_1, window_bounds = array<i64: 2, 4, 256>}, {pipeline_mode = #tpu.pipeline_mode<synchronous>, transform_indices = @transform_2, window_bounds = array<i64: 256, 256>}, {pipeline_mode = #tpu.pipeline_mode<synchronous>, transform_indices = @transform_3, window_bounds = array<i64: 256, 256>}, {transform_indices = @transform_4, window_bounds = array<i64: 2, 256>}]} {
    %c0 = arith.constant 0 : index
    %c0_0 = arith.constant 0 : index
    %c0_1 = arith.constant 0 : index
    %0 = vector.load %arg2[%c0, %c0_0, %c0_1] : memref<2x4x256xf32, #tpu.memory_space<vmem>>, vector<2x4x256xf32>
    %cst = arith.constant dense<0xFF800000> : vector<2x256xf32>
    %1 = vector.multi_reduction <maximumf>, %0, %cst [1] : vector<2x4x256xf32> to vector<2x256xf32>
    %cst_2 = arith.constant dense<0.000000e+00> : vector<2x256xf32>
    %2 = vector.multi_reduction <add>, %0, %cst_2 [1] : vector<2x4x256xf32> to vector<2x256xf32>
    %cst_3 = arith.constant 2.500000e-01 : f32
    %3 = vector.broadcast %cst_3 : f32 to vector<2x256xf32>
    %4 = arith.mulf %2, %3 : vector<2x256xf32>
    %c0_4 = arith.constant 0 : index
    %c0_5 = arith.constant 0 : index
    %5 = vector.load %arg3[%c0_4, %c0_5] : memref<256x256xf32, #tpu.memory_space<vmem>>, vector<256x256xf32>
    %cst_6 = arith.constant dense<0.000000e+00> : vector<2x256xf32>
    %6 = tpu.matmul %1, %5, %cst_6 {dimension_numbers = #tpu.dot_dimension_numbers<[1], [0], [0], [1], [0, 0, 1, 1], [], []>, precision = #tpu.contract_precision<fp32>} : vector<2x256xf32>, vector<256x256xf32>, vector<2x256xf32> -> vector<2x256xf32>
    %c0_7 = arith.constant 0 : index
    %c0_8 = arith.constant 0 : index
    %7 = vector.load %arg4[%c0_7, %c0_8] : memref<256x256xf32, #tpu.memory_space<vmem>>, vector<256x256xf32>
    %cst_9 = arith.constant dense<0.000000e+00> : vector<2x256xf32>
    %8 = tpu.matmul %4, %7, %cst_9 {dimension_numbers = #tpu.dot_dimension_numbers<[1], [0], [0], [1], [0, 0, 1, 1], [], []>, precision = #tpu.contract_precision<fp32>} : vector<2x256xf32>, vector<256x256xf32>, vector<2x256xf32> -> vector<2x256xf32>
    %9 = arith.addf %6, %8 : vector<2x256xf32>
    %c0_10 = arith.constant 0 : index
    %10 = memref.load %arg1[%c0_10] : memref<1xf32, #tpu.memory_space<smem>>
    %11 = vector.broadcast %10 : f32 to vector<2x256xf32>
    %12 = arith.addf %9, %11 : vector<2x256xf32>
    %13 = arith.negf %12 : vector<2x256xf32>
    %14 = math.exp %13 : vector<2x256xf32>
    %cst_11 = arith.constant 1.000000e+00 : f32
    %15 = vector.broadcast %cst_11 : f32 to vector<2x256xf32>
    %16 = arith.addf %15, %14 : vector<2x256xf32>
    %17 = arith.divf %15, %16 : vector<2x256xf32>
    %c0_12 = arith.constant 0 : index
    %c0_13 = arith.constant 0 : index
    %18 = vector.load %arg5[%c0_12, %c0_13] : memref<2x256xf32, #tpu.memory_space<vmem>>, vector<2x256xf32>
    tpu.vector_store %arg5[%c0_12, %c0_13], %17 {strides = array<i32>} : memref<2x256xf32, #tpu.memory_space<vmem>>, vector<2x256xf32>,
    return
  }
  func.func @transform_0(%arg0: i32) -> i32 {
    %c0_i32 = arith.constant 0 : i32
    %c0_i32_0 = arith.constant 0 : i32
    return %c0_i32 : i32
  }
  func.func @transform_1(%arg0: i32) -> (i32, i32, i32) {
    %c0_i32 = arith.constant 0 : i32
    %c0_i32_0 = arith.constant 0 : i32
    %c0_i32_1 = arith.constant 0 : i32
    return %arg0, %c0_i32, %c0_i32_0 : i32, i32, i32
  }
  func.func @transform_2(%arg0: i32) -> (i32, i32) {
    %c0_i32 = arith.constant 0 : i32
    %c0_i32_0 = arith.constant 0 : i32
    %c0_i32_1 = arith.constant 0 : i32
    return %c0_i32, %c0_i32_0 : i32, i32
  }
  func.func @transform_3(%arg0: i32) -> (i32, i32) {
    %c0_i32 = arith.constant 0 : i32
    %c0_i32_0 = arith.constant 0 : i32
    %c0_i32_1 = arith.constant 0 : i32
    return %c0_i32, %c0_i32_0 : i32, i32
  }
  func.func @transform_4(%arg0: i32) -> (i32, i32) {
    %c0_i32 = arith.constant 0 : i32
    %c0_i32_0 = arith.constant 0 : i32
    return %arg0, %c0_i32 : i32, i32
  }
}

</mosaic_0001>

<llo_original>
// kernel: tpu_custom_call.1
$region0: #{tpu_custom_call.1}
  #allocation0 [shape = 'u32[]', space=smem, size = 0x4, offset = 0x4, fixed_abs, tag = 'smem constant byte address 0x4 - core index']
  #allocation1 [shape = 'u32[144,128]{1,0:T(1,128)}', space=vmem, size = 0x12000, scoped, tag = 'internal scratch']
  #allocation2 [shape = 'f32[1]{0:T(128)S(6)}', space=smem, size = 0x200, scoped, tag = 'scoped memory for tpu_custom_call.1']
  %s0 = inlined_call_operand.<no memory space> [shape: f32[1], index: 0, kind: input, shape index: {}]
  %s1 = inlined_call_operand.hbm [shape: f32[2,4,256], index: 1, kind: input, shape index: {}]
  %s2 = inlined_call_operand.hbm [shape: f32[256,256], index: 2, kind: input, shape index: {}]
  %s3 = inlined_call_operand.hbm [shape: f32[256,256], index: 3, kind: input, shape index: {}]
  %s4 = inlined_call_operand.hbm [shape: f32[2,256], index: 4, kind: output, shape index: {}]
  %s5 = sld [smem:[#allocation0]]
  $region38: #{tpu_custom_call.1} parent=0
    _
  %s7 = ssub.s32 1, %s5
  %s8 = scalar_select 0, %s7, %s5
  %9 = sst [smem:[#allocation2]] %s0
  $region1: #{tpu_custom_call.1} parent=0
    #allocation3 [shape = 'u8[8192]{0}', space=vmem, size = 0x2000, scoped, tag = 'input window, operand 1, single buffered']
    #allocation4 [shape = 's32[1]{0}', space=sflag, size = 0x4, scoped, tag = 'scoped memory for tpu_custom_call.1']
    #allocation5 [shape = 's32[1]{0}', space=sflag, size = 0x4, scoped, tag = 'scoped memory for tpu_custom_call.1']
    #allocation6 [shape = 'u8[262144]{0}', space=vmem, size = 0x40000, scoped, tag = 'input window, operand 2, single buffered']
    #allocation7 [shape = 's32[1]{0}', space=sflag, size = 0x4, scoped, tag = 'scoped memory for tpu_custom_call.1']
    #allocation8 [shape = 'u8[262144]{0}', space=vmem, size = 0x40000, scoped, tag = 'input window, operand 3, single buffered']
    #allocation9 [shape = 'u8[2048]{0}', space=vmem, size = 0x800, scoped, tag = 'output window, operand 0, single buffered']
    %10 = vsyncpa [#allocation4], 0
    %11 = vsyncpa [#allocation7], 0
    %12 = vsyncpa [#allocation5], 0
    // Predicated region
    $region2: #{tpu_custom_call.1} parent=1 // pred_check
      _
    $region3: #{tpu_custom_call.1} parent=1 // pred_check_branch
      %14 = sbr.rel (0) target = $region5
    $region4: #{tpu_custom_call.1} parent=1 // pred_region
      _
    $region5: #{tpu_custom_call.1} parent=1 // pred_fallthru
      _
    // Predicated region
    $region6: #{tpu_custom_call.1} parent=1 // pred_check
      _
    $region7: #{tpu_custom_call.1} parent=1 // pred_check_branch
      %16 = sbr.rel (0) target = $region9
    $region8: #{tpu_custom_call.1} parent=1 // pred_region
      %s18 = ssub.s32 256, 256
      %19 = vsyncadd [#allocation4], %s18
      %s20 = sshll.u32 [#allocation3], 4
      %s21 = int_to_ptr.vmem [resolvable:$true] %s20
      %26 = dma.hbm_to_vmem [thread:$0]  %s1, 256, %s21, [#allocation4], 128, 128, 8
    $region9: #{tpu_custom_call.1} parent=1 // pred_fallthru
      _
    // Predicated region
    $region10: #{tpu_custom_call.1} parent=1 // pred_check
      _
    $region11: #{tpu_custom_call.1} parent=1 // pred_check_branch
      %28 = sbr.rel (0) target = $region13
    $region12: #{tpu_custom_call.1} parent=1 // pred_region
      %s30 = ssub.s32 8192, 8192
      %31 = vsyncadd [#allocation7], %s30
      %s32 = sshll.u32 [#allocation6], 4
      %s33 = int_to_ptr.vmem [resolvable:$true] %s32
      %38 = dma.hbm_to_vmem [thread:$0]  %s2, 8192, %s33, [#allocation7], 256, 256, 16
    $region13: #{tpu_custom_call.1} parent=1 // pred_fallthru
      _
    // Predicated region
    $region14: #{tpu_custom_call.1} parent=1 // pred_check
      _
    $region15: #{tpu_custom_call.1} parent=1 // pred_check_branch
      %40 = sbr.rel (0) target = $region17
    $region16: #{tpu_custom_call.1} parent=1 // pred_region
      %s42 = ssub.s32 8192, 8192
      %43 = vsyncadd [#allocation7], %s42
      %s44 = sshll.u32 [#allocation8], 4
      %s45 = int_to_ptr.vmem [resolvable:$true] %s44
      %50 = dma.hbm_to_vmem [thread:$0]  %s3, 8192, %s45, [#allocation7], 256, 256, 16
    $region17: #{tpu_custom_call.1} parent=1 // pred_fallthru
      _
    // Predicated region
    $region18: #{tpu_custom_call.1} parent=1 // pred_check
      _
    $region19: #{tpu_custom_call.1} parent=1 // pred_check_branch
      %52 = sbr.rel (0) target = $region21
    $region20: #{tpu_custom_call.1} parent=1 // pred_region
      %53 = dma.done [#allocation4], 256
    $region21: #{tpu_custom_call.1} parent=1 // pred_fallthru
      _
    // Predicated region
    $region22: #{tpu_custom_call.1} parent=1 // pred_check
      _
    $region23: #{tpu_custom_call.1} parent=1 // pred_check_branch
      %55 = sbr.rel (0) target = $region25
    $region24: #{tpu_custom_call.1} parent=1 // pred_region
      %56 = dma.done [#allocation7], 8192
    $region25: #{tpu_custom_call.1} parent=1 // pred_fallthru
      _
    // Predicated region
    $region26: #{tpu_custom_call.1} parent=1 // pred_check
      _
    $region27: #{tpu_custom_call.1} parent=1 // pred_check_branch
      %58 = sbr.rel (0) target = $region29
    $region28: #{tpu_custom_call.1} parent=1 // pred_region
      %59 = dma.done [#allocation7], 8192
    $region29: #{tpu_custom_call.1} parent=1 // pred_fallthru
      _
    %v60 = vld [vmem:[#allocation3] sm:$0xff]
    %v61 = vld [vmem:[#allocation3 + $0x8] sm:$0xff]
    %v64 = vcombine.high %v60, %v60
    %v65 = vcombine.high %v61, %v61
    %vm68 = vcmask 1043456
    %v69 = vsel %vm68, %v60, -inf
    %v70 = vrot.slane %v69, 4
    %v71 = vmax.f32 %v69, %v70
    %v72 = vrot.slane %v71, 2
    %v73 = vmax.f32 %v71, %v72
    %v74 = vrot.slane %v73, 1
    %v75 = vmax.f32 %v73, %v74
    %v76 = vsel %vm68, %v64, -inf
    %v77 = vrot.slane %v76, 4
    %v78 = vmax.f32 %v76, %v77
    %v79 = vrot.slane %v78, 2
    %v80 = vmax.f32 %v78, %v79
    %v81 = vrot.slane %v80, 1
    %v82 = vmax.f32 %v80, %v81
    %v83 = vsel %vm68, %v61, -inf
    %v84 = vrot.slane %v83, 4
    %v85 = vmax.f32 %v83, %v84
    %v86 = vrot.slane %v85, 2
    %v87 = vmax.f32 %v85, %v86
    %v88 = vrot.slane %v87, 1
    %v89 = vmax.f32 %v87, %v88
    %v90 = vsel %vm68, %v65, -inf
    %v91 = vrot.slane %v90, 4
    %v92 = vmax.f32 %v90, %v91
    %v93 = vrot.slane %v92, 2
    %v94 = vmax.f32 %v92, %v93
    %v95 = vrot.slane %v94, 1
    %v96 = vmax.f32 %v94, %v95
    %v97 = vsel %vm68, %v60, 0.0
    %v98 = vrot.slane %v97, 4
    %v99 = vadd.f32 %v97, %v98
    %v100 = vrot.slane %v99, 2
    %v101 = vadd.f32 %v99, %v100
    %v102 = vrot.slane %v101, 1
    %v103 = vadd.f32 %v101, %v102
    %v104 = vsel %vm68, %v64, 0.0
    %v105 = vrot.slane %v104, 4
    %v106 = vadd.f32 %v104, %v105
    %v107 = vrot.slane %v106, 2
    %v108 = vadd.f32 %v106, %v107
    %v109 = vrot.slane %v108, 1
    %v110 = vadd.f32 %v108, %v109
    %v111 = vsel %vm68, %v61, 0.0
    %v112 = vrot.slane %v111, 4
    %v113 = vadd.f32 %v111, %v112
    %v114 = vrot.slane %v113, 2
    %v115 = vadd.f32 %v113, %v114
    %v116 = vrot.slane %v115, 1
    %v117 = vadd.f32 %v115, %v116
    %v118 = vsel %vm68, %v65, 0.0
    %v119 = vrot.slane %v118, 4
    %v120 = vadd.f32 %v118, %v119
    %v121 = vrot.slane %v120, 2
    %v122 = vadd.f32 %v120, %v121
    %v123 = vrot.slane %v122, 1
    %v124 = vadd.f32 %v122, %v123
    %v125 = vmul.f32 %v103, 0.25
    %v126 = vmul.f32 %v110, 0.25
    %v127 = vmul.f32 %v117, 0.25
    %v128 = vmul.f32 %v124, 0.25
    %v129 = vld [vmem:[#allocation6] sm:$0xff]
    %v130 = vld [vmem:[#allocation6 + $0x8] sm:$0xff]
    %v131 = vld [vmem:[#allocation6 + $0x10] sm:$0xff]
    %v132 = vld [vmem:[#allocation6 + $0x18] sm:$0xff]
    %v133 = vld [vmem:[#allocation6 + $0x20] sm:$0xff]
    %v134 = vld [vmem:[#allocation6 + $0x28] sm:$0xff]
    %v135 = vld [vmem:[#allocation6 + $0x30] sm:$0xff]
    %v136 = vld [vmem:[#allocation6 + $0x38] sm:$0xff]
    %v137 = vld [vmem:[#allocation6 + $0x40] sm:$0xff]
    %v138 = vld [vmem:[#allocation6 + $0x48] sm:$0xff]
    %v139 = vld [vmem:[#allocation6 + $0x50] sm:$0xff]
    %v140 = vld [vmem:[#allocation6 + $0x58] sm:$0xff]
    %v141 = vld [vmem:[#allocation6 + $0x60] sm:$0xff]
    %v142 = vld [vmem:[#allocation6 + $0x68] sm:$0xff]
    %v143 = vld [vmem:[#allocation6 + $0x70] sm:$0xff]
    %v144 = vld [vmem:[#allocation6 + $0x78] sm:$0xff]
    %v145 = vld [vmem:[#allocation6 + $0x80] sm:$0xff]
    %v146 = vld [vmem:[#allocation6 + $0x88] sm:$0xff]
    %v147 = vld [vmem:[#allocation6 + $0x90] sm:$0xff]
    %v148 = vld [vmem:[#allocation6 + $0x98] sm:$0xff]
    %v149 = vld [vmem:[#allocation6 + $0xa0] sm:$0xff]
    %v150 = vld [vmem:[#allocation6 + $0xa8] sm:$0xff]
    %v151 = vld [vmem:[#allocation6 + $0xb0] sm:$0xff]
    %v152 = vld [vmem:[#allocation6 + $0xb8] sm:$0xff]
    %v153 = vld [vmem:[#allocation6 + $0xc0] sm:$0xff]
    %v154 = vld [vmem:[#allocation6 + $0xc8] sm:$0xff]
    %v155 = vld [vmem:[#allocation6 + $0xd0] sm:$0xff]
    %v156 = vld [vmem:[#allocation6 + $0xd8] sm:$0xff]
    %v157 = vld [vmem:[#allocation6 + $0xe0] sm:$0xff]
    %v158 = vld [vmem:[#allocation6 + $0xe8] sm:$0xff]
    %v159 = vld [vmem:[#allocation6 + $0xf0] sm:$0xff]
    %v160 = vld [vmem:[#allocation6 + $0xf8] sm:$0xff]
    %v161 = vld [vmem:[#allocation6 + $0x100] sm:$0xff]
    %v162 = vld [vmem:[#allocation6 + $0x108] sm:$0xff]
    %v163 = vld [vmem:[#allocation6 + $0x110] sm:$0xff]
    %v164 = vld [vmem:[#allocation6 + $0x118] sm:$0xff]
    %v165 = vld [vmem:[#allocation6 + $0x120] sm:$0xff]
    %v166 = vld [vmem:[#allocation6 + $0x128] sm:$0xff]
    %v167 = vld [vmem:[#allocation6 + $0x130] sm:$0xff]
    %v168 = vld [vmem:[#allocation6 + $0x138] sm:$0xff]
    %v169 = vld [vmem:[#allocation6 + $0x140] sm:$0xff]
    %v170 = vld [vmem:[#allocation6 + $0x148] sm:$0xff]
    %v171 = vld [vmem:[#allocation6 + $0x150] sm:$0xff]
    %v172 = vld [vmem:[#allocation6 + $0x158] sm:$0xff]
    %v173 = vld [vmem:[#allocation6 + $0x160] sm:$0xff]
    %v174 = vld [vmem:[#allocation6 + $0x168] sm:$0xff]
    %v175 = vld [vmem:[#allocation6 + $0x170] sm:$0xff]
    %v176 = vld [vmem:[#allocation6 + $0x178] sm:$0xff]
    %v177 = vld [vmem:[#allocation6 + $0x180] sm:$0xff]
    %v178 = vld [vmem:[#allocation6 + $0x188] sm:$0xff]
    %v179 = vld [vmem:[#allocation6 + $0x190] sm:$0xff]
    %v180 = vld [vmem:[#allocation6 + $0x198] sm:$0xff]
    %v181 = vld [vmem:[#allocation6 + $0x1a0] sm:$0xff]
    %v182 = vld [vmem:[#allocation6 + $0x1a8] sm:$0xff]
    %v183 = vld [vmem:[#allocation6 + $0x1b0] sm:$0xff]
    %v184 = vld [vmem:[#allocation6 + $0x1b8] sm:$0xff]
    %v185 = vld [vmem:[#allocation6 + $0x1c0] sm:$0xff]
    %v186 = vld [vmem:[#allocation6 + $0x1c8] sm:$0xff]
    %v187 = vld [vmem:[#allocation6 + $0x1d0] sm:$0xff]
    %v188 = vld [vmem:[#allocation6 + $0x1d8] sm:$0xff]
    %v189 = vld [vmem:[#allocation6 + $0x1e0] sm:$0xff]
    %v190 = vld [vmem:[#allocation6 + $0x1e8] sm:$0xff]
    %v191 = vld [vmem:[#allocation6 + $0x1f0] sm:$0xff]
    %v192 = vld [vmem:[#allocation6 + $0x1f8] sm:$0xff]
    %v193 = vld [vmem:[#allocation8] sm:$0xff]
    %v194 = vld [vmem:[#allocation8 + $0x8] sm:$0xff]
    %v195 = vld [vmem:[#allocation8 + $0x10] sm:$0xff]
    %v196 = vld [vmem:[#allocation8 + $0x18] sm:$0xff]
    %v197 = vld [vmem:[#allocation8 + $0x20] sm:$0xff]
    %v198 = vld [vmem:[#allocation8 + $0x28] sm:$0xff]
    %v199 = vld [vmem:[#allocation8 + $0x30] sm:$0xff]
    %v200 = vld [vmem:[#allocation8 + $0x38] sm:$0xff]
    %v201 = vld [vmem:[#allocation8 + $0x40] sm:$0xff]
    %v202 = vld [vmem:[#allocation8 + $0x48] sm:$0xff]
    %v203 = vld [vmem:[#allocation8 + $0x50] sm:$0xff]
    %v204 = vld [vmem:[#allocation8 + $0x58] sm:$0xff]
    %v205 = vld [vmem:[#allocation8 + $0x60] sm:$0xff]
    %v206 = vld [vmem:[#allocation8 + $0x68] sm:$0xff]
    %v207 = vld [vmem:[#allocation8 + $0x70] sm:$0xff]
    %v208 = vld [vmem:[#allocation8 + $0x78] sm:$0xff]
    %v209 = vld [vmem:[#allocation8 + $0x80] sm:$0xff]
    %v210 = vld [vmem:[#allocation8 + $0x88] sm:$0xff]
    %v211 = vld [vmem:[#allocation8 + $0x90] sm:$0xff]
    %v212 = vld [vmem:[#allocation8 + $0x98] sm:$0xff]
    %v213 = vld [vmem:[#allocation8 + $0xa0] sm:$0xff]
    %v214 = vld [vmem:[#allocation8 + $0xa8] sm:$0xff]
    %v215 = vld [vmem:[#allocation8 + $0xb0] sm:$0xff]
    %v216 = vld [vmem:[#allocation8 + $0xb8] sm:$0xff]
    %v217 = vld [vmem:[#allocation8 + $0xc0] sm:$0xff]
    %v218 = vld [vmem:[#allocation8 + $0xc8] sm:$0xff]
    %v219 = vld [vmem:[#allocation8 + $0xd0] sm:$0xff]
    %v220 = vld [vmem:[#allocation8 + $0xd8] sm:$0xff]
    %v221 = vld [vmem:[#allocation8 + $0xe0] sm:$0xff]
    %v222 = vld [vmem:[#allocation8 + $0xe8] sm:$0xff]
    %v223 = vld [vmem:[#allocation8 + $0xf0] sm:$0xff]
    %v224 = vld [vmem:[#allocation8 + $0xf8] sm:$0xff]
    %v225 = vld [vmem:[#allocation8 + $0x100] sm:$0xff]
    %v226 = vld [vmem:[#allocation8 + $0x108] sm:$0xff]
    %v227 = vld [vmem:[#allocation8 + $0x110] sm:$0xff]
    %v228 = vld [vmem:[#allocation8 + $0x118] sm:$0xff]
    %v229 = vld [vmem:[#allocation8 + $0x120] sm:$0xff]
    %v230 = vld [vmem:[#allocation8 + $0x128] sm:$0xff]
    %v231 = vld [vmem:[#allocation8 + $0x130] sm:$0xff]
    %v232 = vld [vmem:[#allocation8 + $0x138] sm:$0xff]
    %v233 = vld [vmem:[#allocation8 + $0x140] sm:$0xff]
    %v234 = vld [vmem:[#allocation8 + $0x148] sm:$0xff]
    %v235 = vld [vmem:[#allocation8 + $0x150] sm:$0xff]
    %v236 = vld [vmem:[#allocation8 + $0x158] sm:$0xff]
    %v237 = vld [vmem:[#allocation8 + $0x160] sm:$0xff]
    %v238 = vld [vmem:[#allocation8 + $0x168] sm:$0xff]
    %v239 = vld [vmem:[#allocation8 + $0x170] sm:$0xff]
    %v240 = vld [vmem:[#allocation8 + $0x178] sm:$0xff]
    %v241 = vld [vmem:[#allocation8 + $0x180] sm:$0xff]
    %v242 = vld [vmem:[#allocation8 + $0x188] sm:$0xff]
    %v243 = vld [vmem:[#allocation8 + $0x190] sm:$0xff]
    %v244 = vld [vmem:[#allocation8 + $0x198] sm:$0xff]
    %v245 = vld [vmem:[#allocation8 + $0x1a0] sm:$0xff]
    %v246 = vld [vmem:[#allocation8 + $0x1a8] sm:$0xff]
    %v247 = vld [vmem:[#allocation8 + $0x1b0] sm:$0xff]
    %v248 = vld [vmem:[#allocation8 + $0x1b8] sm:$0xff]
    %v249 = vld [vmem:[#allocation8 + $0x1c0] sm:$0xff]
    %v250 = vld [vmem:[#allocation8 + $0x1c8] sm:$0xff]
    %v251 = vld [vmem:[#allocation8 + $0x1d0] sm:$0xff]
    %v252 = vld [vmem:[#allocation8 + $0x1d8] sm:$0xff]
    %v253 = vld [vmem:[#allocation8 + $0x1e0] sm:$0xff]
    %v254 = vld [vmem:[#allocation8 + $0x1e8] sm:$0xff]
    %v255 = vld [vmem:[#allocation8 + $0x1f0] sm:$0xff]
    %v256 = vld [vmem:[#allocation8 + $0x1f8] sm:$0xff]
    %vm261 = vcmask 1041409
    %v262 = vsel %vm261, %v127, %v125
    %v263 = vsel %vm261, %v128, %v126
    %v266 = vand.u32 %v194, 4294901760
    %267 = vmatprep.subr.mxu0 %v266
    %v268 = vand.u32 %v193, 4294901760
    %269 = vmatpush1.msra.mxu0 %v268
    %v270 = vand.u32 %v196, 4294901760
    %271 = vmatprep.subr.mxu0 %v270
    %v272 = vand.u32 %v195, 4294901760
    %273 = vmatpush1.msra.mxu0 %v272
    %v274 = vand.u32 %v198, 4294901760
    %275 = vmatprep.subr.mxu0 %v274
    %v276 = vand.u32 %v197, 4294901760
    %277 = vmatpush1.msra.mxu0 %v276
    %v278 = vand.u32 %v200, 4294901760
    %279 = vmatprep.subr.mxu0 %v278
    %v280 = vand.u32 %v199, 4294901760
    %281 = vmatpush1.msra.mxu0 %v280
    %v282 = vand.u32 %v202, 4294901760
    %283 = vmatprep.subr.mxu0 %v282
    %v284 = vand.u32 %v201, 4294901760
    %285 = vmatpush1.msra.mxu0 %v284
    %v286 = vand.u32 %v204, 4294901760
    %287 = vmatprep.subr.mxu0 %v286
    %v288 = vand.u32 %v203, 4294901760
    %289 = vmatpush1.msra.mxu0 %v288
    %v290 = vand.u32 %v206, 4294901760
    %291 = vmatprep.subr.mxu0 %v290
    %v292 = vand.u32 %v205, 4294901760
    %293 = vmatpush1.msra.mxu0 %v292
    %v294 = vand.u32 %v208, 4294901760
    %295 = vmatprep.subr.mxu0 %v294
    %v296 = vand.u32 %v207, 4294901760
    %297 = vmatpush1.msra.mxu0 %v296
    %v298 = vand.u32 %v210, 4294901760
    %299 = vmatprep.subr.mxu0 %v298
    %v300 = vand.u32 %v209, 4294901760
    %301 = vmatpush1.msra.mxu0 %v300
    %v302 = vand.u32 %v212, 4294901760
    %303 = vmatprep.subr.mxu0 %v302
    %v304 = vand.u32 %v211, 4294901760
    %305 = vmatpush1.msra.mxu0 %v304
    %v306 = vand.u32 %v214, 4294901760
    %307 = vmatprep.subr.mxu0 %v306
    %v308 = vand.u32 %v213, 4294901760
    %309 = vmatpush1.msra.mxu0 %v308
    %v310 = vand.u32 %v216, 4294901760
    %311 = vmatprep.subr.mxu0 %v310
    %v312 = vand.u32 %v215, 4294901760
    %313 = vmatpush1.msra.mxu0 %v312
    %v314 = vand.u32 %v218, 4294901760
    %315 = vmatprep.subr.mxu0 %v314
    %v316 = vand.u32 %v217, 4294901760
    %317 = vmatpush1.msra.mxu0 %v316
    %v318 = vand.u32 %v220, 4294901760
    %319 = vmatprep.subr.mxu0 %v318
    %v320 = vand.u32 %v219, 4294901760
    %321 = vmatpush1.msra.mxu0 %v320
    %v322 = vand.u32 %v222, 4294901760
    %323 = vmatprep.subr.mxu0 %v322
    %v324 = vand.u32 %v221, 4294901760
    %325 = vmatpush1.msra.mxu0 %v324
    %v326 = vand.u32 %v224, 4294901760
    %327 = vmatprep.subr.mxu0 %v326
    %v328 = vand.u32 %v223, 4294901760
    %329 = vmatpush1.msra.mxu0 %v328
    %v330 = vand.u32 %v226, 4294901760
    %331 = vmatprep.subr.mxu0 %v330
    %v332 = vand.u32 %v225, 4294901760
    %333 = vmatpush1.msra.mxu0 %v332
    %v334 = vand.u32 %v228, 4294901760
    %335 = vmatprep.subr.mxu0 %v334
    %v336 = vand.u32 %v227, 4294901760
    %337 = vmatpush1.msra.mxu0 %v336
    %v338 = vand.u32 %v230, 4294901760
    %339 = vmatprep.subr.mxu0 %v338
    %v340 = vand.u32 %v229, 4294901760
    %341 = vmatpush1.msra.mxu0 %v340
    %v342 = vand.u32 %v232, 4294901760
    %343 = vmatprep.subr.mxu0 %v342
    %v344 = vand.u32 %v231, 4294901760
    %345 = vmatpush1.msra.mxu0 %v344
    %v346 = vand.u32 %v234, 4294901760
    %347 = vmatprep.subr.mxu0 %v346
    %v348 = vand.u32 %v233, 4294901760
    %349 = vmatpush1.msra.mxu0 %v348
    %v350 = vand.u32 %v236, 4294901760
    %351 = vmatprep.subr.mxu0 %v350
    %v352 = vand.u32 %v235, 4294901760
    %353 = vmatpush1.msra.mxu0 %v352
    %v354 = vand.u32 %v238, 4294901760
    %355 = vmatprep.subr.mxu0 %v354
    %v356 = vand.u32 %v237, 4294901760
    %357 = vmatpush1.msra.mxu0 %v356
    %v358 = vand.u32 %v240, 4294901760
    %359 = vmatprep.subr.mxu0 %v358
    %v360 = vand.u32 %v239, 4294901760
    %361 = vmatpush1.msra.mxu0 %v360
    %v362 = vand.u32 %v242, 4294901760
    %363 = vmatprep.subr.mxu0 %v362
    %v364 = vand.u32 %v241, 4294901760
    %365 = vmatpush1.msra.mxu0 %v364
    %v366 = vand.u32 %v244, 4294901760
    %367 = vmatprep.subr.mxu0 %v366
    %v368 = vand.u32 %v243, 4294901760
    %369 = vmatpush1.msra.mxu0 %v368
    %v370 = vand.u32 %v246, 4294901760
    %371 = vmatprep.subr.mxu0 %v370
    %v372 = vand.u32 %v245, 4294901760
    %373 = vmatpush1.msra.mxu0 %v372
    %v374 = vand.u32 %v248, 4294901760
    %375 = vmatprep.subr.mxu0 %v374
    %v376 = vand.u32 %v247, 4294901760
    %377 = vmatpush1.msra.mxu0 %v376
    %v378 = vand.u32 %v250, 4294901760
    %379 = vmatprep.subr.mxu0 %v378
    %v380 = vand.u32 %v249, 4294901760
    %381 = vmatpush1.msra.mxu0 %v380
    %v382 = vand.u32 %v252, 4294901760
    %383 = vmatprep.subr.mxu0 %v382
    %v384 = vand.u32 %v251, 4294901760
    %385 = vmatpush1.msra.mxu0 %v384
    %v386 = vand.u32 %v254, 4294901760
    %387 = vmatprep.subr.mxu0 %v386
    %v388 = vand.u32 %v253, 4294901760
    %389 = vmatpush1.msra.mxu0 %v388
    %v390 = vand.u32 %v256, 4294901760
    %391 = vmatprep.subr.mxu0 %v390
    %v392 = vand.u32 %v255, 4294901760
    %393 = vmatpush1.msra.mxu0 %v392
    %v394 = vand.u32 %v263, 4294901760
    %v395 = vsub.f32 %v263, %v394
    %v396 = vand.u32 %v395, 4294901760
    %v397 = vsub.f32 %v395, %v396
    %v398 = vand.u32 %v397, 4294901760
    %399 = vmatprep.mubr.f32.mxu0 %v398
    %v400 = vand.u32 %v262, 4294901760
    %v401 = vsub.f32 %v262, %v400
    %v402 = vand.u32 %v401, 4294901760
    %v403 = vsub.f32 %v401, %v402
    %v404 = vand.u32 %v403, 4294901760
    %405 = vmatmul.mubr.f32.gmra.mrb[0].mxu0 %v404
    %v406 = vpop.f32.mrb[0].mxu0
    %v407 = vadd.f32 0.0, %v406
    %v408 = vpop.f32.mrb[0].mxu0
    %v409 = vadd.f32 0.0, %v408
    %410 = vdwg.mxu0
    %v411 = vand.u32 %v194, 4294901760
    %v412 = vsub.f32 %v194, %v411
    %v413 = vand.u32 %v412, 4294901760
    %v414 = vsub.f32 %v412, %v413
    %v415 = vand.u32 %v414, 4294901760
    %416 = vmatprep.subr.mxu0 %v415
    %v417 = vand.u32 %v193, 4294901760
    %v418 = vsub.f32 %v193, %v417
    %v419 = vand.u32 %v418, 4294901760
    %v420 = vsub.f32 %v418, %v419
    %v421 = vand.u32 %v420, 4294901760
    %422 = vmatpush1.msra.mxu0 %v421
    %v423 = vand.u32 %v196, 4294901760
    %v424 = vsub.f32 %v196, %v423
    %v425 = vand.u32 %v424, 4294901760
    %v426 = vsub.f32 %v424, %v425
    %v427 = vand.u32 %v426, 4294901760
    %428 = vmatprep.subr.mxu0 %v427
    %v429 = vand.u32 %v195, 4294901760
    %v430 = vsub.f32 %v195, %v429
    %v431 = vand.u32 %v430, 4294901760
    %v432 = vsub.f32 %v430, %v431
    %v433 = vand.u32 %v432, 4294901760
    %434 = vmatpush1.msra.mxu0 %v433
    %v435 = vand.u32 %v198, 4294901760
    %v436 = vsub.f32 %v198, %v435
    %v437 = vand.u32 %v436, 4294901760
    %v438 = vsub.f32 %v436, %v437
    %v439 = vand.u32 %v438, 4294901760
    %440 = vmatprep.subr.mxu0 %v439
    %v441 = vand.u32 %v197, 4294901760
    %v442 = vsub.f32 %v197, %v441
    %v443 = vand.u32 %v442, 4294901760
    %v444 = vsub.f32 %v442, %v443
    %v445 = vand.u32 %v444, 4294901760
    %446 = vmatpush1.msra.mxu0 %v445
    %v447 = vand.u32 %v200, 4294901760
    %v448 = vsub.f32 %v200, %v447
    %v449 = vand.u32 %v448, 4294901760
    %v450 = vsub.f32 %v448, %v449
    %v451 = vand.u32 %v450, 4294901760
    %452 = vmatprep.subr.mxu0 %v451
    %v453 = vand.u32 %v199, 4294901760
    %v454 = vsub.f32 %v199, %v453
    %v455 = vand.u32 %v454, 4294901760
    %v456 = vsub.f32 %v454, %v455
    %v457 = vand.u32 %v456, 4294901760
    %458 = vmatpush1.msra.mxu0 %v457
    %v459 = vand.u32 %v202, 4294901760
    %v460 = vsub.f32 %v202, %v459
    %v461 = vand.u32 %v460, 4294901760
    %v462 = vsub.f32 %v460, %v461
    %v463 = vand.u32 %v462, 4294901760
    %464 = vmatprep.subr.mxu0 %v463
    %v465 = vand.u32 %v201, 4294901760
    %v466 = vsub.f32 %v201, %v465
    %v467 = vand.u32 %v466, 4294901760
    %v468 = vsub.f32 %v466, %v467
    %v469 = vand.u32 %v468, 4294901760
    %470 = vmatpush1.msra.mxu0 %v469
    %v471 = vand.u32 %v204, 4294901760
    %v472 = vsub.f32 %v204, %v471
    %v473 = vand.u32 %v472, 4294901760
    %v474 = vsub.f32 %v472, %v473
    %v475 = vand.u32 %v474, 4294901760
    %476 = vmatprep.subr.mxu0 %v475
    %v477 = vand.u32 %v203, 4294901760
    %v478 = vsub.f32 %v203, %v477
    %v479 = vand.u32 %v478, 4294901760
    %v480 = vsub.f32 %v478, %v479
    %v481 = vand.u32 %v480, 4294901760
    %482 = vmatpush1.msra.mxu0 %v481
    %v483 = vand.u32 %v206, 4294901760
    %v484 = vsub.f32 %v206, %v483
    %v485 = vand.u32 %v484, 4294901760
    %v486 = vsub.f32 %v484, %v485
    %v487 = vand.u32 %v486, 4294901760
    %488 = vmatprep.subr.mxu0 %v487
    %v489 = vand.u32 %v205, 4294901760
    %v490 = vsub.f32 %v205, %v489
    %v491 = vand.u32 %v490, 4294901760
    %v492 = vsub.f32 %v490, %v491
    %v493 = vand.u32 %v492, 4294901760
    %494 = vmatpush1.msra.mxu0 %v493
    %v495 = vand.u32 %v208, 4294901760
    %v496 = vsub.f32 %v208, %v495
    %v497 = vand.u32 %v496, 4294901760
    %v498 = vsub.f32 %v496, %v497
    %v499 = vand.u32 %v498, 4294901760
    %500 = vmatprep.subr.mxu0 %v499
    %v501 = vand.u32 %v207, 4294901760
    %v502 = vsub.f32 %v207, %v501
    %v503 = vand.u32 %v502, 4294901760
    %v504 = vsub.f32 %v502, %v503
    %v505 = vand.u32 %v504, 4294901760
    %506 = vmatpush1.msra.mxu0 %v505
    %v507 = vand.u32 %v210, 4294901760
    %v508 = vsub.f32 %v210, %v507
    %v509 = vand.u32 %v508, 4294901760
    %v510 = vsub.f32 %v508, %v509
    %v511 = vand.u32 %v510, 4294901760
    %512 = vmatprep.subr.mxu0 %v511
    %v513 = vand.u32 %v209, 4294901760
    %v514 = vsub.f32 %v209, %v513
    %v515 = vand.u32 %v514, 4294901760
    %v516 = vsub.f32 %v514, %v515
    %v517 = vand.u32 %v516, 4294901760
    %518 = vmatpush1.msra.mxu0 %v517
    %v519 = vand.u32 %v212, 4294901760
    %v520 = vsub.f32 %v212, %v519
    %v521 = vand.u32 %v520, 4294901760
    %v522 = vsub.f32 %v520, %v521
    %v523 = vand.u32 %v522, 4294901760
    %524 = vmatprep.subr.mxu0 %v523
    %v525 = vand.u32 %v211, 4294901760
    %v526 = vsub.f32 %v211, %v525
    %v527 = vand.u32 %v526, 4294901760
    %v528 = vsub.f32 %v526, %v527
    %v529 = vand.u32 %v528, 4294901760
    %530 = vmatpush1.msra.mxu0 %v529
    %v531 = vand.u32 %v214, 4294901760
    %v532 = vsub.f32 %v214, %v531
    %v533 = vand.u32 %v532, 4294901760
    %v534 = vsub.f32 %v532, %v533
    %v535 = vand.u32 %v534, 4294901760
    %536 = vmatprep.subr.mxu0 %v535
    %v537 = vand.u32 %v213, 4294901760
    %v538 = vsub.f32 %v213, %v537
    %v539 = vand.u32 %v538, 4294901760
    %v540 = vsub.f32 %v538, %v539
    %v541 = vand.u32 %v540, 4294901760
    %542 = vmatpush1.msra.mxu0 %v541
    %v543 = vand.u32 %v216, 4294901760
    %v544 = vsub.f32 %v216, %v543
    %v545 = vand.u32 %v544, 4294901760
    %v546 = vsub.f32 %v544, %v545
    %v547 = vand.u32 %v546, 4294901760
    %548 = vmatprep.subr.mxu0 %v547
    %v549 = vand.u32 %v215, 4294901760
    %v550 = vsub.f32 %v215, %v549
    %v551 = vand.u32 %v550, 4294901760
    %v552 = vsub.f32 %v550, %v551
    %v553 = vand.u32 %v552, 4294901760
    %554 = vmatpush1.msra.mxu0 %v553
    %v555 = vand.u32 %v218, 4294901760
    %v556 = vsub.f32 %v218, %v555
    %v557 = vand.u32 %v556, 4294901760
    %v558 = vsub.f32 %v556, %v557
    %v559 = vand.u32 %v558, 4294901760
    %560 = vmatprep.subr.mxu0 %v559
    %v561 = vand.u32 %v217, 4294901760
    %v562 = vsub.f32 %v217, %v561
    %v563 = vand.u32 %v562, 4294901760
    %v564 = vsub.f32 %v562, %v563
    %v565 = vand.u32 %v564, 4294901760
    %566 = vmatpush1.msra.mxu0 %v565
    %v567 = vand.u32 %v220, 4294901760
    %v568 = vsub.f32 %v220, %v567
    %v569 = vand.u32 %v568, 4294901760
    %v570 = vsub.f32 %v568, %v569
    %v571 = vand.u32 %v570, 4294901760
    %572 = vmatprep.subr.mxu0 %v571
    %v573 = vand.u32 %v219, 4294901760
    %v574 = vsub.f32 %v219, %v573
    %v575 = vand.u32 %v574, 4294901760
    %v576 = vsub.f32 %v574, %v575
    %v577 = vand.u32 %v576, 4294901760
    %578 = vmatpush1.msra.mxu0 %v577
    %v579 = vand.u32 %v222, 4294901760
    %v580 = vsub.f32 %v222, %v579
    %v581 = vand.u32 %v580, 4294901760
    %v582 = vsub.f32 %v580, %v581
    %v583 = vand.u32 %v582, 4294901760
    %584 = vmatprep.subr.mxu0 %v583
    %v585 = vand.u32 %v221, 4294901760
    %v586 = vsub.f32 %v221, %v585
    %v587 = vand.u32 %v586, 4294901760
    %v588 = vsub.f32 %v586, %v587
    %v589 = vand.u32 %v588, 4294901760
    %590 = vmatpush1.msra.mxu0 %v589
    %v591 = vand.u32 %v224, 4294901760
    %v592 = vsub.f32 %v224, %v591
    %v593 = vand.u32 %v592, 4294901760
    %v594 = vsub.f32 %v592, %v593
    %v595 = vand.u32 %v594, 4294901760
    %596 = vmatprep.subr.mxu0 %v595
    %v597 = vand.u32 %v223, 4294901760
    %v598 = vsub.f32 %v223, %v597
    %v599 = vand.u32 %v598, 4294901760
    %v600 = vsub.f32 %v598, %v599
    %v601 = vand.u32 %v600, 4294901760
    %602 = vmatpush1.msra.mxu0 %v601
    %v603 = vand.u32 %v226, 4294901760
    %v604 = vsub.f32 %v226, %v603
    %v605 = vand.u32 %v604, 4294901760
    %v606 = vsub.f32 %v604, %v605
    %v607 = vand.u32 %v606, 4294901760
    %608 = vmatprep.subr.mxu0 %v607
    %v609 = vand.u32 %v225, 4294901760
    %v610 = vsub.f32 %v225, %v609
    %v611 = vand.u32 %v610, 4294901760
    %v612 = vsub.f32 %v610, %v611
    %v613 = vand.u32 %v612, 4294901760
    %614 = vmatpush1.msra.mxu0 %v613
    %v615 = vand.u32 %v228, 4294901760
    %v616 = vsub.f32 %v228, %v615
    %v617 = vand.u32 %v616, 4294901760
    %v618 = vsub.f32 %v616, %v617
    %v619 = vand.u32 %v618, 4294901760
    %620 = vmatprep.subr.mxu0 %v619
    %v621 = vand.u32 %v227, 4294901760
    %v622 = vsub.f32 %v227, %v621
    %v623 = vand.u32 %v622, 4294901760
    %v624 = vsub.f32 %v622, %v623
    %v625 = vand.u32 %v624, 4294901760
    %626 = vmatpush1.msra.mxu0 %v625
    %v627 = vand.u32 %v230, 4294901760
    %v628 = vsub.f32 %v230, %v627
    %v629 = vand.u32 %v628, 4294901760
    %v630 = vsub.f32 %v628, %v629
    %v631 = vand.u32 %v630, 4294901760
    %632 = vmatprep.subr.mxu0 %v631
    %v633 = vand.u32 %v229, 4294901760
    %v634 = vsub.f32 %v229, %v633
    %v635 = vand.u32 %v634, 4294901760
    %v636 = vsub.f32 %v634, %v635
    %v637 = vand.u32 %v636, 4294901760
    %638 = vmatpush1.msra.mxu0 %v637
    %v639 = vand.u32 %v232, 4294901760
    %v640 = vsub.f32 %v232, %v639
    %v641 = vand.u32 %v640, 4294901760
    %v642 = vsub.f32 %v640, %v641
    %v643 = vand.u32 %v642, 4294901760
    %644 = vmatprep.subr.mxu0 %v643
    %v645 = vand.u32 %v231, 4294901760
    %v646 = vsub.f32 %v231, %v645
    %v647 = vand.u32 %v646, 4294901760
    %v648 = vsub.f32 %v646, %v647
    %v649 = vand.u32 %v648, 4294901760
    %650 = vmatpush1.msra.mxu0 %v649
    %v651 = vand.u32 %v234, 4294901760
    %v652 = vsub.f32 %v234, %v651
    %v653 = vand.u32 %v652, 4294901760
    %v654 = vsub.f32 %v652, %v653
    %v655 = vand.u32 %v654, 4294901760
    %656 = vmatprep.subr.mxu0 %v655
    %v657 = vand.u32 %v233, 4294901760
    %v658 = vsub.f32 %v233, %v657
    %v659 = vand.u32 %v658, 4294901760
    %v660 = vsub.f32 %v658, %v659
    %v661 = vand.u32 %v660, 4294901760
    %662 = vmatpush1.msra.mxu0 %v661
    %v663 = vand.u32 %v236, 4294901760
    %v664 = vsub.f32 %v236, %v663
    %v665 = vand.u32 %v664, 4294901760
    %v666 = vsub.f32 %v664, %v665
    %v667 = vand.u32 %v666, 4294901760
    %668 = vmatprep.subr.mxu0 %v667
    %v669 = vand.u32 %v235, 4294901760
    %v670 = vsub.f32 %v235, %v669
    %v671 = vand.u32 %v670, 4294901760
    %v672 = vsub.f32 %v670, %v671
    %v673 = vand.u32 %v672, 4294901760
    %674 = vmatpush1.msra.mxu0 %v673
    %v675 = vand.u32 %v238, 4294901760
    %v676 = vsub.f32 %v238, %v675
    %v677 = vand.u32 %v676, 4294901760
    %v678 = vsub.f32 %v676, %v677
    %v679 = vand.u32 %v678, 4294901760
    %680 = vmatprep.subr.mxu0 %v679
    %v681 = vand.u32 %v237, 4294901760
    %v682 = vsub.f32 %v237, %v681
    %v683 = vand.u32 %v682, 4294901760
    %v684 = vsub.f32 %v682, %v683
    %v685 = vand.u32 %v684, 4294901760
    %686 = vmatpush1.msra.mxu0 %v685
    %v687 = vand.u32 %v240, 4294901760
    %v688 = vsub.f32 %v240, %v687
    %v689 = vand.u32 %v688, 4294901760
    %v690 = vsub.f32 %v688, %v689
    %v691 = vand.u32 %v690, 4294901760
    %692 = vmatprep.subr.mxu0 %v691
    %v693 = vand.u32 %v239, 4294901760
    %v694 = vsub.f32 %v239, %v693
    %v695 = vand.u32 %v694, 4294901760
    %v696 = vsub.f32 %v694, %v695
    %v697 = vand.u32 %v696, 4294901760
    %698 = vmatpush1.msra.mxu0 %v697
    %v699 = vand.u32 %v242, 4294901760
    %v700 = vsub.f32 %v242, %v699
    %v701 = vand.u32 %v700, 4294901760
    %v702 = vsub.f32 %v700, %v701
    %v703 = vand.u32 %v702, 4294901760
    %704 = vmatprep.subr.mxu0 %v703
    %v705 = vand.u32 %v241, 4294901760
    %v706 = vsub.f32 %v241, %v705
    %v707 = vand.u32 %v706, 4294901760
    %v708 = vsub.f32 %v706, %v707
    %v709 = vand.u32 %v708, 4294901760
    %710 = vmatpush1.msra.mxu0 %v709
    %v711 = vand.u32 %v244, 4294901760
    %v712 = vsub.f32 %v244, %v711
    %v713 = vand.u32 %v712, 4294901760
    %v714 = vsub.f32 %v712, %v713
    %v715 = vand.u32 %v714, 4294901760
    %716 = vmatprep.subr.mxu0 %v715
    %v717 = vand.u32 %v243, 4294901760
    %v718 = vsub.f32 %v243, %v717
    %v719 = vand.u32 %v718, 4294901760
    %v720 = vsub.f32 %v718, %v719
    %v721 = vand.u32 %v720, 4294901760
    %722 = vmatpush1.msra.mxu0 %v721
    %v723 = vand.u32 %v246, 4294901760
    %v724 = vsub.f32 %v246, %v723
    %v725 = vand.u32 %v724, 4294901760
    %v726 = vsub.f32 %v724, %v725
    %v727 = vand.u32 %v726, 4294901760
    %728 = vmatprep.subr.mxu0 %v727
    %v729 = vand.u32 %v245, 4294901760
    %v730 = vsub.f32 %v245, %v729
    %v731 = vand.u32 %v730, 4294901760
    %v732 = vsub.f32 %v730, %v731
    %v733 = vand.u32 %v732, 4294901760
    %734 = vmatpush1.msra.mxu0 %v733
    %v735 = vand.u32 %v248, 4294901760
    %v736 = vsub.f32 %v248, %v735
    %v737 = vand.u32 %v736, 4294901760
    %v738 = vsub.f32 %v736, %v737
    %v739 = vand.u32 %v738, 4294901760
    %740 = vmatprep.subr.mxu0 %v739
    %v741 = vand.u32 %v247, 4294901760
    %v742 = vsub.f32 %v247, %v741
    %v743 = vand.u32 %v742, 4294901760
    %v744 = vsub.f32 %v742, %v743
    %v745 = vand.u32 %v744, 4294901760
    %746 = vmatpush1.msra.mxu0 %v745
    %v747 = vand.u32 %v250, 4294901760
    %v748 = vsub.f32 %v250, %v747
    %v749 = vand.u32 %v748, 4294901760
    %v750 = vsub.f32 %v748, %v749
    %v751 = vand.u32 %v750, 4294901760
    %752 = vmatprep.subr.mxu0 %v751
    %v753 = vand.u32 %v249, 4294901760
    %v754 = vsub.f32 %v249, %v753
    %v755 = vand.u32 %v754, 4294901760
    %v756 = vsub.f32 %v754, %v755
    %v757 = vand.u32 %v756, 4294901760
    %758 = vmatpush1.msra.mxu0 %v757
    %v759 = vand.u32 %v252, 4294901760
    %v760 = vsub.f32 %v252, %v759
    %v761 = vand.u32 %v760, 4294901760
    %v762 = vsub.f32 %v760, %v761
    %v763 = vand.u32 %v762, 4294901760
    %764 = vmatprep.subr.mxu0 %v763
    %v765 = vand.u32 %v251, 4294901760
    %v766 = vsub.f32 %v251, %v765
    %v767 = vand.u32 %v766, 4294901760
    %v768 = vsub.f32 %v766, %v767
    %v769 = vand.u32 %v768, 4294901760
    %770 = vmatpush1.msra.mxu0 %v769
    %v771 = vand.u32 %v254, 4294901760
    %v772 = vsub.f32 %v254, %v771
    %v773 = vand.u32 %v772, 4294901760
    %v774 = vsub.f32 %v772, %v773
    %v775 = vand.u32 %v774, 4294901760
    %776 = vmatprep.subr.mxu0 %v775
    %v777 = vand.u32 %v253, 4294901760
    %v778 = vsub.f32 %v253, %v777
    %v779 = vand.u32 %v778, 4294901760
    %v780 = vsub.f32 %v778, %v779
    %v781 = vand.u32 %v780, 4294901760
    %782 = vmatpush1.msra.mxu0 %v781
    %v783 = vand.u32 %v256, 4294901760
    %v784 = vsub.f32 %v256, %v783
    %v785 = vand.u32 %v784, 4294901760
    %v786 = vsub.f32 %v784, %v785
    %v787 = vand.u32 %v786, 4294901760
    %788 = vmatprep.subr.mxu0 %v787
    %v789 = vand.u32 %v255, 4294901760
    %v790 = vsub.f32 %v255, %v789
    %v791 = vand.u32 %v790, 4294901760
    %v792 = vsub.f32 %v790, %v791
    %v793 = vand.u32 %v792, 4294901760
    %794 = vmatpush1.msra.mxu0 %v793
    %v795 = vand.u32 %v263, 4294901760
    %796 = vmatprep.mubr.f32.mxu0 %v795
    %v797 = vand.u32 %v262, 4294901760
    %798 = vmatmul.mubr.f32.gmra.mrb[0].mxu0 %v797
    %v799 = vpop.f32.mrb[0].mxu0
    %v800 = vadd.f32 %v407, %v799
    %v801 = vpop.f32.mrb[0].mxu0
    %v802 = vadd.f32 %v409, %v801
    %803 = vdwg.mxu0
    %v804 = vand.u32 %v194, 4294901760
    %v805 = vsub.f32 %v194, %v804
    %806 = vmatprep.subr.mxu0 %v805
    %v807 = vand.u32 %v193, 4294901760
    %v808 = vsub.f32 %v193, %v807
    %809 = vmatpush1.msra.mxu0 %v808
    %v810 = vand.u32 %v196, 4294901760
    %v811 = vsub.f32 %v196, %v810
    %812 = vmatprep.subr.mxu0 %v811
    %v813 = vand.u32 %v195, 4294901760
    %v814 = vsub.f32 %v195, %v813
    %815 = vmatpush1.msra.mxu0 %v814
    %v816 = vand.u32 %v198, 4294901760
    %v817 = vsub.f32 %v198, %v816
    %818 = vmatprep.subr.mxu0 %v817
    %v819 = vand.u32 %v197, 4294901760
    %v820 = vsub.f32 %v197, %v819
    %821 = vmatpush1.msra.mxu0 %v820
    %v822 = vand.u32 %v200, 4294901760
    %v823 = vsub.f32 %v200, %v822
    %824 = vmatprep.subr.mxu0 %v823
    %v825 = vand.u32 %v199, 4294901760
    %v826 = vsub.f32 %v199, %v825
    %827 = vmatpush1.msra.mxu0 %v826
    %v828 = vand.u32 %v202, 4294901760
    %v829 = vsub.f32 %v202, %v828
    %830 = vmatprep.subr.mxu0 %v829
    %v831 = vand.u32 %v201, 4294901760
    %v832 = vsub.f32 %v201, %v831
    %833 = vmatpush1.msra.mxu0 %v832
    %v834 = vand.u32 %v204, 4294901760
    %v835 = vsub.f32 %v204, %v834
    %836 = vmatprep.subr.mxu0 %v835
    %v837 = vand.u32 %v203, 4294901760
    %v838 = vsub.f32 %v203, %v837
    %839 = vmatpush1.msra.mxu0 %v838
    %v840 = vand.u32 %v206, 4294901760
    %v841 = vsub.f32 %v206, %v840
    %842 = vmatprep.subr.mxu0 %v841
    %v843 = vand.u32 %v205, 4294901760
    %v844 = vsub.f32 %v205, %v843
    %845 = vmatpush1.msra.mxu0 %v844
    %v846 = vand.u32 %v208, 4294901760
    %v847 = vsub.f32 %v208, %v846
    %848 = vmatprep.subr.mxu0 %v847
    %v849 = vand.u32 %v207, 4294901760
    %v850 = vsub.f32 %v207, %v849
    %851 = vmatpush1.msra.mxu0 %v850
    %v852 = vand.u32 %v210, 4294901760
    %v853 = vsub.f32 %v210, %v852
    %854 = vmatprep.subr.mxu0 %v853
    %v855 = vand.u32 %v209, 4294901760
    %v856 = vsub.f32 %v209, %v855
    %857 = vmatpush1.msra.mxu0 %v856
    %v858 = vand.u32 %v212, 4294901760
    %v859 = vsub.f32 %v212, %v858
    %860 = vmatprep.subr.mxu0 %v859
    %v861 = vand.u32 %v211, 4294901760
    %v862 = vsub.f32 %v211, %v861
    %863 = vmatpush1.msra.mxu0 %v862
    %v864 = vand.u32 %v214, 4294901760
    %v865 = vsub.f32 %v214, %v864
    %866 = vmatprep.subr.mxu0 %v865
    %v867 = vand.u32 %v213, 4294901760
    %v868 = vsub.f32 %v213, %v867
    %869 = vmatpush1.msra.mxu0 %v868
    %v870 = vand.u32 %v216, 4294901760
    %v871 = vsub.f32 %v216, %v870
    %872 = vmatprep.subr.mxu0 %v871
    %v873 = vand.u32 %v215, 4294901760
    %v874 = vsub.f32 %v215, %v873
    %875 = vmatpush1.msra.mxu0 %v874
    %v876 = vand.u32 %v218, 4294901760
    %v877 = vsub.f32 %v218, %v876
    %878 = vmatprep.subr.mxu0 %v877
    %v879 = vand.u32 %v217, 4294901760
    %v880 = vsub.f32 %v217, %v879
    %881 = vmatpush1.msra.mxu0 %v880
    %v882 = vand.u32 %v220, 4294901760
    %v883 = vsub.f32 %v220, %v882
    %884 = vmatprep.subr.mxu0 %v883
    %v885 = vand.u32 %v219, 4294901760
    %v886 = vsub.f32 %v219, %v885
    %887 = vmatpush1.msra.mxu0 %v886
    %v888 = vand.u32 %v222, 4294901760
    %v889 = vsub.f32 %v222, %v888
    %890 = vmatprep.subr.mxu0 %v889
    %v891 = vand.u32 %v221, 4294901760
    %v892 = vsub.f32 %v221, %v891
    %893 = vmatpush1.msra.mxu0 %v892
    %v894 = vand.u32 %v224, 4294901760
    %v895 = vsub.f32 %v224, %v894
    %896 = vmatprep.subr.mxu0 %v895
    %v897 = vand.u32 %v223, 4294901760
    %v898 = vsub.f32 %v223, %v897
    %899 = vmatpush1.msra.mxu0 %v898
    %v900 = vand.u32 %v226, 4294901760
    %v901 = vsub.f32 %v226, %v900
    %902 = vmatprep.subr.mxu0 %v901
    %v903 = vand.u32 %v225, 4294901760
    %v904 = vsub.f32 %v225, %v903
    %905 = vmatpush1.msra.mxu0 %v904
    %v906 = vand.u32 %v228, 4294901760
    %v907 = vsub.f32 %v228, %v906
    %908 = vmatprep.subr.mxu0 %v907
    %v909 = vand.u32 %v227, 4294901760
    %v910 = vsub.f32 %v227, %v909
    %911 = vmatpush1.msra.mxu0 %v910
    %v912 = vand.u32 %v230, 4294901760
    %v913 = vsub.f32 %v230, %v912
    %914 = vmatprep.subr.mxu0 %v913
    %v915 = vand.u32 %v229, 4294901760
    %v916 = vsub.f32 %v229, %v915
    %917 = vmatpush1.msra.mxu0 %v916
    %v918 = vand.u32 %v232, 4294901760
    %v919 = vsub.f32 %v232, %v918
    %920 = vmatprep.subr.mxu0 %v919
    %v921 = vand.u32 %v231, 4294901760
    %v922 = vsub.f32 %v231, %v921
    %923 = vmatpush1.msra.mxu0 %v922
    %v924 = vand.u32 %v234, 4294901760
    %v925 = vsub.f32 %v234, %v924
    %926 = vmatprep.subr.mxu0 %v925
    %v927 = vand.u32 %v233, 4294901760
    %v928 = vsub.f32 %v233, %v927
    %929 = vmatpush1.msra.mxu0 %v928
    %v930 = vand.u32 %v236, 4294901760
    %v931 = vsub.f32 %v236, %v930
    %932 = vmatprep.subr.mxu0 %v931
    %v933 = vand.u32 %v235, 4294901760
    %v934 = vsub.f32 %v235, %v933
    %935 = vmatpush1.msra.mxu0 %v934
    %v936 = vand.u32 %v238, 4294901760
    %v937 = vsub.f32 %v238, %v936
    %938 = vmatprep.subr.mxu0 %v937
    %v939 = vand.u32 %v237, 4294901760
    %v940 = vsub.f32 %v237, %v939
    %941 = vmatpush1.msra.mxu0 %v940
    %v942 = vand.u32 %v240, 4294901760
    %v943 = vsub.f32 %v240, %v942
    %944 = vmatprep.subr.mxu0 %v943
    %v945 = vand.u32 %v239, 4294901760
    %v946 = vsub.f32 %v239, %v945
    %947 = vmatpush1.msra.mxu0 %v946
    %v948 = vand.u32 %v242, 4294901760
    %v949 = vsub.f32 %v242, %v948
    %950 = vmatprep.subr.mxu0 %v949
    %v951 = vand.u32 %v241, 4294901760
    %v952 = vsub.f32 %v241, %v951
    %953 = vmatpush1.msra.mxu0 %v952
    %v954 = vand.u32 %v244, 4294901760
    %v955 = vsub.f32 %v244, %v954
    %956 = vmatprep.subr.mxu0 %v955
    %v957 = vand.u32 %v243, 4294901760
    %v958 = vsub.f32 %v243, %v957
    %959 = vmatpush1.msra.mxu0 %v958
    %v960 = vand.u32 %v246, 4294901760
    %v961 = vsub.f32 %v246, %v960
    %962 = vmatprep.subr.mxu0 %v961
    %v963 = vand.u32 %v245, 4294901760
    %v964 = vsub.f32 %v245, %v963
    %965 = vmatpush1.msra.mxu0 %v964
    %v966 = vand.u32 %v248, 4294901760
    %v967 = vsub.f32 %v248, %v966
    %968 = vmatprep.subr.mxu0 %v967
    %v969 = vand.u32 %v247, 4294901760
    %v970 = vsub.f32 %v247, %v969
    %971 = vmatpush1.msra.mxu0 %v970
    %v972 = vand.u32 %v250, 4294901760
    %v973 = vsub.f32 %v250, %v972
    %974 = vmatprep.subr.mxu0 %v973
    %v975 = vand.u32 %v249, 4294901760
    %v976 = vsub.f32 %v249, %v975
    %977 = vmatpush1.msra.mxu0 %v976
    %v978 = vand.u32 %v252, 4294901760
    %v979 = vsub.f32 %v252, %v978
    %980 = vmatprep.subr.mxu0 %v979
    %v981 = vand.u32 %v251, 4294901760
    %v982 = vsub.f32 %v251, %v981
    %983 = vmatpush1.msra.mxu0 %v982
    %v984 = vand.u32 %v254, 4294901760
    %v985 = vsub.f32 %v254, %v984
    %986 = vmatprep.subr.mxu0 %v985
    %v987 = vand.u32 %v253, 4294901760
    %v988 = vsub.f32 %v253, %v987
    %989 = vmatpush1.msra.mxu0 %v988
    %v990 = vand.u32 %v256, 4294901760
    %v991 = vsub.f32 %v256, %v990
    %992 = vmatprep.subr.mxu0 %v991
    %v993 = vand.u32 %v255, 4294901760
    %v994 = vsub.f32 %v255, %v993
    %995 = vmatpush1.msra.mxu0 %v994
    %v996 = vand.u32 %v263, 4294901760
    %v997 = vsub.f32 %v263, %v996
    %998 = vmatprep.mubr.f32.mxu0 %v997
    %v999 = vand.u32 %v262, 4294901760
    %v1000 = vsub.f32 %v262, %v999
    %1001 = vmatmul.mubr.f32.gmra.mrb[0].mxu0 %v1000
    %v1002 = vpop.f32.mrb[0].mxu0
    %v1003 = vadd.f32 %v800, %v1002
    %v1004 = vpop.f32.mrb[0].mxu0
    %v1005 = vadd.f32 %v802, %v1004
    %1006 = vdwg.mxu0
    %v1007 = vand.u32 %v194, 4294901760
    %1008 = vmatprep.subr.mxu0 %v1007
    %v1009 = vand.u32 %v193, 4294901760
    %1010 = vmatpush1.msra.mxu0 %v1009
    %v1011 = vand.u32 %v196, 4294901760
    %1012 = vmatprep.subr.mxu0 %v1011
    %v1013 = vand.u32 %v195, 4294901760
    %1014 = vmatpush1.msra.mxu0 %v1013
    %v1015 = vand.u32 %v198, 4294901760
    %1016 = vmatprep.subr.mxu0 %v1015
    %v1017 = vand.u32 %v197, 4294901760
    %1018 = vmatpush1.msra.mxu0 %v1017
    %v1019 = vand.u32 %v200, 4294901760
    %1020 = vmatprep.subr.mxu0 %v1019
    %v1021 = vand.u32 %v199, 4294901760
    %1022 = vmatpush1.msra.mxu0 %v1021
    %v1023 = vand.u32 %v202, 4294901760
    %1024 = vmatprep.subr.mxu0 %v1023
    %v1025 = vand.u32 %v201, 4294901760
    %1026 = vmatpush1.msra.mxu0 %v1025
    %v1027 = vand.u32 %v204, 4294901760
    %1028 = vmatprep.subr.mxu0 %v1027
    %v1029 = vand.u32 %v203, 4294901760
    %1030 = vmatpush1.msra.mxu0 %v1029
    %v1031 = vand.u32 %v206, 4294901760
    %1032 = vmatprep.subr.mxu0 %v1031
    %v1033 = vand.u32 %v205, 4294901760
    %1034 = vmatpush1.msra.mxu0 %v1033
    %v1035 = vand.u32 %v208, 4294901760
    %1036 = vmatprep.subr.mxu0 %v1035
    %v1037 = vand.u32 %v207, 4294901760
    %1038 = vmatpush1.msra.mxu0 %v1037
    %v1039 = vand.u32 %v210, 4294901760
    %1040 = vmatprep.subr.mxu0 %v1039
    %v1041 = vand.u32 %v209, 4294901760
    %1042 = vmatpush1.msra.mxu0 %v1041
    %v1043 = vand.u32 %v212, 4294901760
    %1044 = vmatprep.subr.mxu0 %v1043
    %v1045 = vand.u32 %v211, 4294901760
    %1046 = vmatpush1.msra.mxu0 %v1045
    %v1047 = vand.u32 %v214, 4294901760
    %1048 = vmatprep.subr.mxu0 %v1047
    %v1049 = vand.u32 %v213, 4294901760
    %1050 = vmatpush1.msra.mxu0 %v1049
    %v1051 = vand.u32 %v216, 4294901760
    %1052 = vmatprep.subr.mxu0 %v1051
    %v1053 = vand.u32 %v215, 4294901760
    %1054 = vmatpush1.msra.mxu0 %v1053
    %v1055 = vand.u32 %v218, 4294901760
    %1056 = vmatprep.subr.mxu0 %v1055
    %v1057 = vand.u32 %v217, 4294901760
    %1058 = vmatpush1.msra.mxu0 %v1057
    %v1059 = vand.u32 %v220, 4294901760
    %1060 = vmatprep.subr.mxu0 %v1059
    %v1061 = vand.u32 %v219, 4294901760
    %1062 = vmatpush1.msra.mxu0 %v1061
    %v1063 = vand.u32 %v222, 4294901760
    %1064 = vmatprep.subr.mxu0 %v1063
    %v1065 = vand.u32 %v221, 4294901760
    %1066 = vmatpush1.msra.mxu0 %v1065
    %v1067 = vand.u32 %v224, 4294901760
    %1068 = vmatprep.subr.mxu0 %v1067
    %v1069 = vand.u32 %v223, 4294901760
    %1070 = vmatpush1.msra.mxu0 %v1069
    %v1071 = vand.u32 %v226, 4294901760
    %1072 = vmatprep.subr.mxu0 %v1071
    %v1073 = vand.u32 %v225, 4294901760
    %1074 = vmatpush1.msra.mxu0 %v1073
    %v1075 = vand.u32 %v228, 4294901760
    %1076 = vmatprep.subr.mxu0 %v1075
    %v1077 = vand.u32 %v227, 4294901760
    %1078 = vmatpush1.msra.mxu0 %v1077
    %v1079 = vand.u32 %v230, 4294901760
    %1080 = vmatprep.subr.mxu0 %v1079
    %v1081 = vand.u32 %v229, 4294901760
    %1082 = vmatpush1.msra.mxu0 %v1081
    %v1083 = vand.u32 %v232, 4294901760
    %1084 = vmatprep.subr.mxu0 %v1083
    %v1085 = vand.u32 %v231, 4294901760
    %1086 = vmatpush1.msra.mxu0 %v1085
    %v1087 = vand.u32 %v234, 4294901760
    %1088 = vmatprep.subr.mxu0 %v1087
    %v1089 = vand.u32 %v233, 4294901760
    %1090 = vmatpush1.msra.mxu0 %v1089
    %v1091 = vand.u32 %v236, 4294901760
    %1092 = vmatprep.subr.mxu0 %v1091
    %v1093 = vand.u32 %v235, 4294901760
    %1094 = vmatpush1.msra.mxu0 %v1093
    %v1095 = vand.u32 %v238, 4294901760
    %1096 = vmatprep.subr.mxu0 %v1095
    %v1097 = vand.u32 %v237, 4294901760
    %1098 = vmatpush1.msra.mxu0 %v1097
    %v1099 = vand.u32 %v240, 4294901760
    %1100 = vmatprep.subr.mxu0 %v1099
    %v1101 = vand.u32 %v239, 4294901760
    %1102 = vmatpush1.msra.mxu0 %v1101
    %v1103 = vand.u32 %v242, 4294901760
    %1104 = vmatprep.subr.mxu0 %v1103
    %v1105 = vand.u32 %v241, 4294901760
    %1106 = vmatpush1.msra.mxu0 %v1105
    %v1107 = vand.u32 %v244, 4294901760
    %1108 = vmatprep.subr.mxu0 %v1107
    %v1109 = vand.u32 %v243, 4294901760
    %1110 = vmatpush1.msra.mxu0 %v1109
    %v1111 = vand.u32 %v246, 4294901760
    %1112 = vmatprep.subr.mxu0 %v1111
    %v1113 = vand.u32 %v245, 4294901760
    %1114 = vmatpush1.msra.mxu0 %v1113
    %v1115 = vand.u32 %v248, 4294901760
    %1116 = vmatprep.subr.mxu0 %v1115
    %v1117 = vand.u32 %v247, 4294901760
    %1118 = vmatpush1.msra.mxu0 %v1117
    %v1119 = vand.u32 %v250, 4294901760
    %1120 = vmatprep.subr.mxu0 %v1119
    %v1121 = vand.u32 %v249, 4294901760
    %1122 = vmatpush1.msra.mxu0 %v1121
    %v1123 = vand.u32 %v252, 4294901760
    %1124 = vmatprep.subr.mxu0 %v1123
    %v1125 = vand.u32 %v251, 4294901760
    %1126 = vmatpush1.msra.mxu0 %v1125
    %v1127 = vand.u32 %v254, 4294901760
    %1128 = vmatprep.subr.mxu0 %v1127
    %v1129 = vand.u32 %v253, 4294901760
    %1130 = vmatpush1.msra.mxu0 %v1129
    %v1131 = vand.u32 %v256, 4294901760
    %1132 = vmatprep.subr.mxu0 %v1131
    %v1133 = vand.u32 %v255, 4294901760
    %1134 = vmatpush1.msra.mxu0 %v1133
    %v1135 = vand.u32 %v263, 4294901760
    %v1136 = vsub.f32 %v263, %v1135
    %v1137 = vand.u32 %v1136, 4294901760
    %1138 = vmatprep.mubr.f32.mxu0 %v1137
    %v1139 = vand.u32 %v262, 4294901760
    %v1140 = vsub.f32 %v262, %v1139
    %v1141 = vand.u32 %v1140, 4294901760
    %1142 = vmatmul.mubr.f32.gmra.mrb[0].mxu0 %v1141
    %v1143 = vpop.f32.mrb[0].mxu0
    %v1144 = vadd.f32 %v1003, %v1143
    %v1145 = vpop.f32.mrb[0].mxu0
    %v1146 = vadd.f32 %v1005, %v1145
    %1147 = vdwg.mxu0
    %v1148 = vand.u32 %v194, 4294901760
    %v1149 = vsub.f32 %v194, %v1148
    %v1150 = vand.u32 %v1149, 4294901760
    %1151 = vmatprep.subr.mxu0 %v1150
    %v1152 = vand.u32 %v193, 4294901760
    %v1153 = vsub.f32 %v193, %v1152
    %v1154 = vand.u32 %v1153, 4294901760
    %1155 = vmatpush1.msra.mxu0 %v1154
    %v1156 = vand.u32 %v196, 4294901760
    %v1157 = vsub.f32 %v196, %v1156
    %v1158 = vand.u32 %v1157, 4294901760
    %1159 = vmatprep.subr.mxu0 %v1158
    %v1160 = vand.u32 %v195, 4294901760
    %v1161 = vsub.f32 %v195, %v1160
    %v1162 = vand.u32 %v1161, 4294901760
    %1163 = vmatpush1.msra.mxu0 %v1162
    %v1164 = vand.u32 %v198, 4294901760
    %v1165 = vsub.f32 %v198, %v1164
    %v1166 = vand.u32 %v1165, 4294901760
    %1167 = vmatprep.subr.mxu0 %v1166
    %v1168 = vand.u32 %v197, 4294901760
    %v1169 = vsub.f32 %v197, %v1168
    %v1170 = vand.u32 %v1169, 4294901760
    %1171 = vmatpush1.msra.mxu0 %v1170
    %v1172 = vand.u32 %v200, 4294901760
    %v1173 = vsub.f32 %v200, %v1172
    %v1174 = vand.u32 %v1173, 4294901760
    %1175 = vmatprep.subr.mxu0 %v1174
    %v1176 = vand.u32 %v199, 4294901760
    %v1177 = vsub.f32 %v199, %v1176
    %v1178 = vand.u32 %v1177, 4294901760
    %1179 = vmatpush1.msra.mxu0 %v1178
    %v1180 = vand.u32 %v202, 4294901760
    %v1181 = vsub.f32 %v202, %v1180
    %v1182 = vand.u32 %v1181, 4294901760
    %1183 = vmatprep.subr.mxu0 %v1182
    %v1184 = vand.u32 %v201, 4294901760
    %v1185 = vsub.f32 %v201, %v1184
    %v1186 = vand.u32 %v1185, 4294901760
    %1187 = vmatpush1.msra.mxu0 %v1186
    %v1188 = vand.u32 %v204, 4294901760
    %v1189 = vsub.f32 %v204, %v1188
    %v1190 = vand.u32 %v1189, 4294901760
    %1191 = vmatprep.subr.mxu0 %v1190
    %v1192 = vand.u32 %v203, 4294901760
    %v1193 = vsub.f32 %v203, %v1192
    %v1194 = vand.u32 %v1193, 4294901760
    %1195 = vmatpush1.msra.mxu0 %v1194
    %v1196 = vand.u32 %v206, 4294901760
    %v1197 = vsub.f32 %v206, %v1196
    %v1198 = vand.u32 %v1197, 4294901760
    %1199 = vmatprep.subr.mxu0 %v1198
    %v1200 = vand.u32 %v205, 4294901760
    %v1201 = vsub.f32 %v205, %v1200
    %v1202 = vand.u32 %v1201, 4294901760
    %1203 = vmatpush1.msra.mxu0 %v1202
    %v1204 = vand.u32 %v208, 4294901760
    %v1205 = vsub.f32 %v208, %v1204
    %v1206 = vand.u32 %v1205, 4294901760
    %1207 = vmatprep.subr.mxu0 %v1206
    %v1208 = vand.u32 %v207, 4294901760
    %v1209 = vsub.f32 %v207, %v1208
    %v1210 = vand.u32 %v1209, 4294901760
    %1211 = vmatpush1.msra.mxu0 %v1210
    %v1212 = vand.u32 %v210, 4294901760
    %v1213 = vsub.f32 %v210, %v1212
    %v1214 = vand.u32 %v1213, 4294901760
    %1215 = vmatprep.subr.mxu0 %v1214
    %v1216 = vand.u32 %v209, 4294901760
    %v1217 = vsub.f32 %v209, %v1216
    %v1218 = vand.u32 %v1217, 4294901760
    %1219 = vmatpush1.msra.mxu0 %v1218
    %v1220 = vand.u32 %v212, 4294901760
    %v1221 = vsub.f32 %v212, %v1220
    %v1222 = vand.u32 %v1221, 4294901760
    %1223 = vmatprep.subr.mxu0 %v1222
    %v1224 = vand.u32 %v211, 4294901760
    %v1225 = vsub.f32 %v211, %v1224
    %v1226 = vand.u32 %v1225, 4294901760
    %1227 = vmatpush1.msra.mxu0 %v1226
    %v1228 = vand.u32 %v214, 4294901760
    %v1229 = vsub.f32 %v214, %v1228
    %v1230 = vand.u32 %v1229, 4294901760
    %1231 = vmatprep.subr.mxu0 %v1230
    %v1232 = vand.u32 %v213, 4294901760
    %v1233 = vsub.f32 %v213, %v1232
    %v1234 = vand.u32 %v1233, 4294901760
    %1235 = vmatpush1.msra.mxu0 %v1234
    %v1236 = vand.u32 %v216, 4294901760
    %v1237 = vsub.f32 %v216, %v1236
    %v1238 = vand.u32 %v1237, 4294901760
    %1239 = vmatprep.subr.mxu0 %v1238
    %v1240 = vand.u32 %v215, 4294901760
    %v1241 = vsub.f32 %v215, %v1240
    %v1242 = vand.u32 %v1241, 4294901760
    %1243 = vmatpush1.msra.mxu0 %v1242
    %v1244 = vand.u32 %v218, 4294901760
    %v1245 = vsub.f32 %v218, %v1244
    %v1246 = vand.u32 %v1245, 4294901760
    %1247 = vmatprep.subr.mxu0 %v1246
    %v1248 = vand.u32 %v217, 4294901760
    %v1249 = vsub.f32 %v217, %v1248
    %v1250 = vand.u32 %v1249, 4294901760
    %1251 = vmatpush1.msra.mxu0 %v1250
    %v1252 = vand.u32 %v220, 4294901760
    %v1253 = vsub.f32 %v220, %v1252
    %v1254 = vand.u32 %v1253, 4294901760
    %1255 = vmatprep.subr.mxu0 %v1254
    %v1256 = vand.u32 %v219, 4294901760
    %v1257 = vsub.f32 %v219, %v1256
    %v1258 = vand.u32 %v1257, 4294901760
    %1259 = vmatpush1.msra.mxu0 %v1258
    %v1260 = vand.u32 %v222, 4294901760
    %v1261 = vsub.f32 %v222, %v1260
    %v1262 = vand.u32 %v1261, 4294901760
    %1263 = vmatprep.subr.mxu0 %v1262
    %v1264 = vand.u32 %v221, 4294901760
    %v1265 = vsub.f32 %v221, %v1264
    %v1266 = vand.u32 %v1265, 4294901760
    %1267 = vmatpush1.msra.mxu0 %v1266
    %v1268 = vand.u32 %v224, 4294901760
    %v1269 = vsub.f32 %v224, %v1268
    %v1270 = vand.u32 %v1269, 4294901760
    %1271 = vmatprep.subr.mxu0 %v1270
    %v1272 = vand.u32 %v223, 4294901760
    %v1273 = vsub.f32 %v223, %v1272
    %v1274 = vand.u32 %v1273, 4294901760
    %1275 = vmatpush1.msra.mxu0 %v1274
    %v1276 = vand.u32 %v226, 4294901760
    %v1277 = vsub.f32 %v226, %v1276
    %v1278 = vand.u32 %v1277, 4294901760
    %1279 = vmatprep.subr.mxu0 %v1278
    %v1280 = vand.u32 %v225, 4294901760
    %v1281 = vsub.f32 %v225, %v1280
    %v1282 = vand.u32 %v1281, 4294901760
    %1283 = vmatpush1.msra.mxu0 %v1282
    %v1284 = vand.u32 %v228, 4294901760
    %v1285 = vsub.f32 %v228, %v1284
    %v1286 = vand.u32 %v1285, 4294901760
    %1287 = vmatprep.subr.mxu0 %v1286
    %v1288 = vand.u32 %v227, 4294901760
    %v1289 = vsub.f32 %v227, %v1288
    %v1290 = vand.u32 %v1289, 4294901760
    %1291 = vmatpush1.msra.mxu0 %v1290
    %v1292 = vand.u32 %v230, 4294901760
    %v1293 = vsub.f32 %v230, %v1292
    %v1294 = vand.u32 %v1293, 4294901760
    %1295 = vmatprep.subr.mxu0 %v1294
    %v1296 = vand.u32 %v229, 4294901760
    %v1297 = vsub.f32 %v229, %v1296
    %v1298 = vand.u32 %v1297, 4294901760
    %1299 = vmatpush1.msra.mxu0 %v1298
    %v1300 = vand.u32 %v232, 4294901760
    %v1301 = vsub.f32 %v232, %v1300
    %v1302 = vand.u32 %v1301, 4294901760
    %1303 = vmatprep.subr.mxu0 %v1302
    %v1304 = vand.u32 %v231, 4294901760
    %v1305 = vsub.f32 %v231, %v1304
    %v1306 = vand.u32 %v1305, 4294901760
    %1307 = vmatpush1.msra.mxu0 %v1306
    %v1308 = vand.u32 %v234, 4294901760
    %v1309 = vsub.f32 %v234, %v1308
    %v1310 = vand.u32 %v1309, 4294901760
    %1311 = vmatprep.subr.mxu0 %v1310
    %v1312 = vand.u32 %v233, 4294901760
    %v1313 = vsub.f32 %v233, %v1312
    %v1314 = vand.u32 %v1313, 4294901760
    %1315 = vmatpush1.msra.mxu0 %v1314
    %v1316 = vand.u32 %v236, 4294901760
    %v1317 = vsub.f32 %v236, %v1316
    %v1318 = vand.u32 %v1317, 4294901760
    %1319 = vmatprep.subr.mxu0 %v1318
    %v1320 = vand.u32 %v235, 4294901760
    %v1321 = vsub.f32 %v235, %v1320
    %v1322 = vand.u32 %v1321, 4294901760
    %1323 = vmatpush1.msra.mxu0 %v1322
    %v1324 = vand.u32 %v238, 4294901760
    %v1325 = vsub.f32 %v238, %v1324
    %v1326 = vand.u32 %v1325, 4294901760
    %1327 = vmatprep.subr.mxu0 %v1326
    %v1328 = vand.u32 %v237, 4294901760
    %v1329 = vsub.f32 %v237, %v1328
    %v1330 = vand.u32 %v1329, 4294901760
    %1331 = vmatpush1.msra.mxu0 %v1330
    %v1332 = vand.u32 %v240, 4294901760
    %v1333 = vsub.f32 %v240, %v1332
    %v1334 = vand.u32 %v1333, 4294901760
    %1335 = vmatprep.subr.mxu0 %v1334
    %v1336 = vand.u32 %v239, 4294901760
    %v1337 = vsub.f32 %v239, %v1336
    %v1338 = vand.u32 %v1337, 4294901760
    %1339 = vmatpush1.msra.mxu0 %v1338
    %v1340 = vand.u32 %v242, 4294901760
    %v1341 = vsub.f32 %v242, %v1340
    %v1342 = vand.u32 %v1341, 4294901760
    %1343 = vmatprep.subr.mxu0 %v1342
    %v1344 = vand.u32 %v241, 4294901760
    %v1345 = vsub.f32 %v241, %v1344
    %v1346 = vand.u32 %v1345, 4294901760
    %1347 = vmatpush1.msra.mxu0 %v1346
    %v1348 = vand.u32 %v244, 4294901760
    %v1349 = vsub.f32 %v244, %v1348
    %v1350 = vand.u32 %v1349, 4294901760
    %1351 = vmatprep.subr.mxu0 %v1350
    %v1352 = vand.u32 %v243, 4294901760
    %v1353 = vsub.f32 %v243, %v1352
    %v1354 = vand.u32 %v1353, 4294901760
    %1355 = vmatpush1.msra.mxu0 %v1354
    %v1356 = vand.u32 %v246, 4294901760
    %v1357 = vsub.f32 %v246, %v1356
    %v1358 = vand.u32 %v1357, 4294901760
    %1359 = vmatprep.subr.mxu0 %v1358
    %v1360 = vand.u32 %v245, 4294901760
    %v1361 = vsub.f32 %v245, %v1360
    %v1362 = vand.u32 %v1361, 4294901760
    %1363 = vmatpush1.msra.mxu0 %v1362
    %v1364 = vand.u32 %v248, 4294901760
    %v1365 = vsub.f32 %v248, %v1364
    %v1366 = vand.u32 %v1365, 4294901760
    %1367 = vmatprep.subr.mxu0 %v1366
    %v1368 = vand.u32 %v247, 4294901760
    %v1369 = vsub.f32 %v247, %v1368
    %v1370 = vand.u32 %v1369, 4294901760
    %1371 = vmatpush1.msra.mxu0 %v1370
    %v1372 = vand.u32 %v250, 4294901760
    %v1373 = vsub.f32 %v250, %v1372
    %v1374 = vand.u32 %v1373, 4294901760
    %1375 = vmatprep.subr.mxu0 %v1374
    %v1376 = vand.u32 %v249, 4294901760
    %v1377 = vsub.f32 %v249, %v1376
    %v1378 = vand.u32 %v1377, 4294901760
    %1379 = vmatpush1.msra.mxu0 %v1378
    %v1380 = vand.u32 %v252, 4294901760
    %v1381 = vsub.f32 %v252, %v1380
    %v1382 = vand.u32 %v1381, 4294901760
    %1383 = vmatprep.subr.mxu0 %v1382
    %v1384 = vand.u32 %v251, 4294901760
    %v1385 = vsub.f32 %v251, %v1384
    %v1386 = vand.u32 %v1385, 4294901760
    %1387 = vmatpush1.msra.mxu0 %v1386
    %v1388 = vand.u32 %v254, 4294901760
    %v1389 = vsub.f32 %v254, %v1388
    %v1390 = vand.u32 %v1389, 4294901760
    %1391 = vmatprep.subr.mxu0 %v1390
    %v1392 = vand.u32 %v253, 4294901760
    %v1393 = vsub.f32 %v253, %v1392
    %v1394 = vand.u32 %v1393, 4294901760
    %1395 = vmatpush1.msra.mxu0 %v1394
    %v1396 = vand.u32 %v256, 4294901760
    %v1397 = vsub.f32 %v256, %v1396
    %v1398 = vand.u32 %v1397, 4294901760
    %1399 = vmatprep.subr.mxu0 %v1398
    %v1400 = vand.u32 %v255, 4294901760
    %v1401 = vsub.f32 %v255, %v1400
    %v1402 = vand.u32 %v1401, 4294901760
    %1403 = vmatpush1.msra.mxu0 %v1402
    %v1404 = vand.u32 %v263, 4294901760
    %1405 = vmatprep.mubr.f32.mxu0 %v1404
    %v1406 = vand.u32 %v262, 4294901760
    %1407 = vmatmul.mubr.f32.gmra.mrb[0].mxu0 %v1406
    %v1408 = vpop.f32.mrb[0].mxu0
    %v1409 = vadd.f32 %v1144, %v1408
    %v1410 = vpop.f32.mrb[0].mxu0
    %v1411 = vadd.f32 %v1146, %v1410
    %1412 = vdwg.mxu0
    %v1413 = vand.u32 %v194, 4294901760
    %1414 = vmatprep.subr.mxu0 %v1413
    %v1415 = vand.u32 %v193, 4294901760
    %1416 = vmatpush1.msra.mxu0 %v1415
    %v1417 = vand.u32 %v196, 4294901760
    %1418 = vmatprep.subr.mxu0 %v1417
    %v1419 = vand.u32 %v195, 4294901760
    %1420 = vmatpush1.msra.mxu0 %v1419
    %v1421 = vand.u32 %v198, 4294901760
    %1422 = vmatprep.subr.mxu0 %v1421
    %v1423 = vand.u32 %v197, 4294901760
    %1424 = vmatpush1.msra.mxu0 %v1423
    %v1425 = vand.u32 %v200, 4294901760
    %1426 = vmatprep.subr.mxu0 %v1425
    %v1427 = vand.u32 %v199, 4294901760
    %1428 = vmatpush1.msra.mxu0 %v1427
    %v1429 = vand.u32 %v202, 4294901760
    %1430 = vmatprep.subr.mxu0 %v1429
    %v1431 = vand.u32 %v201, 4294901760
    %1432 = vmatpush1.msra.mxu0 %v1431
    %v1433 = vand.u32 %v204, 4294901760
    %1434 = vmatprep.subr.mxu0 %v1433
    %v1435 = vand.u32 %v203, 4294901760
    %1436 = vmatpush1.msra.mxu0 %v1435
    %v1437 = vand.u32 %v206, 4294901760
    %1438 = vmatprep.subr.mxu0 %v1437
    %v1439 = vand.u32 %v205, 4294901760
    %1440 = vmatpush1.msra.mxu0 %v1439
    %v1441 = vand.u32 %v208, 4294901760
    %1442 = vmatprep.subr.mxu0 %v1441
    %v1443 = vand.u32 %v207, 4294901760
    %1444 = vmatpush1.msra.mxu0 %v1443
    %v1445 = vand.u32 %v210, 4294901760
    %1446 = vmatprep.subr.mxu0 %v1445
    %v1447 = vand.u32 %v209, 4294901760
    %1448 = vmatpush1.msra.mxu0 %v1447
    %v1449 = vand.u32 %v212, 4294901760
    %1450 = vmatprep.subr.mxu0 %v1449
    %v1451 = vand.u32 %v211, 4294901760
    %1452 = vmatpush1.msra.mxu0 %v1451
    %v1453 = vand.u32 %v214, 4294901760
    %1454 = vmatprep.subr.mxu0 %v1453
    %v1455 = vand.u32 %v213, 4294901760
    %1456 = vmatpush1.msra.mxu0 %v1455
    %v1457 = vand.u32 %v216, 4294901760
    %1458 = vmatprep.subr.mxu0 %v1457
    %v1459 = vand.u32 %v215, 4294901760
    %1460 = vmatpush1.msra.mxu0 %v1459
    %v1461 = vand.u32 %v218, 4294901760
    %1462 = vmatprep.subr.mxu0 %v1461
    %v1463 = vand.u32 %v217, 4294901760
    %1464 = vmatpush1.msra.mxu0 %v1463
    %v1465 = vand.u32 %v220, 4294901760
    %1466 = vmatprep.subr.mxu0 %v1465
    %v1467 = vand.u32 %v219, 4294901760
    %1468 = vmatpush1.msra.mxu0 %v1467
    %v1469 = vand.u32 %v222, 4294901760
    %1470 = vmatprep.subr.mxu0 %v1469
    %v1471 = vand.u32 %v221, 4294901760
    %1472 = vmatpush1.msra.mxu0 %v1471
    %v1473 = vand.u32 %v224, 4294901760
    %1474 = vmatprep.subr.mxu0 %v1473
    %v1475 = vand.u32 %v223, 4294901760
    %1476 = vmatpush1.msra.mxu0 %v1475
    %v1477 = vand.u32 %v226, 4294901760
    %1478 = vmatprep.subr.mxu0 %v1477
    %v1479 = vand.u32 %v225, 4294901760
    %1480 = vmatpush1.msra.mxu0 %v1479
    %v1481 = vand.u32 %v228, 4294901760
    %1482 = vmatprep.subr.mxu0 %v1481
    %v1483 = vand.u32 %v227, 4294901760
    %1484 = vmatpush1.msra.mxu0 %v1483
    %v1485 = vand.u32 %v230, 4294901760
    %1486 = vmatprep.subr.mxu0 %v1485
    %v1487 = vand.u32 %v229, 4294901760
    %1488 = vmatpush1.msra.mxu0 %v1487
    %v1489 = vand.u32 %v232, 4294901760
    %1490 = vmatprep.subr.mxu0 %v1489
    %v1491 = vand.u32 %v231, 4294901760
    %1492 = vmatpush1.msra.mxu0 %v1491
    %v1493 = vand.u32 %v234, 4294901760
    %1494 = vmatprep.subr.mxu0 %v1493
    %v1495 = vand.u32 %v233, 4294901760
    %1496 = vmatpush1.msra.mxu0 %v1495
    %v1497 = vand.u32 %v236, 4294901760
    %1498 = vmatprep.subr.mxu0 %v1497
    %v1499 = vand.u32 %v235, 4294901760
    %1500 = vmatpush1.msra.mxu0 %v1499
    %v1501 = vand.u32 %v238, 4294901760
    %1502 = vmatprep.subr.mxu0 %v1501
    %v1503 = vand.u32 %v237, 4294901760
    %1504 = vmatpush1.msra.mxu0 %v1503
    %v1505 = vand.u32 %v240, 4294901760
    %1506 = vmatprep.subr.mxu0 %v1505
    %v1507 = vand.u32 %v239, 4294901760
    %1508 = vmatpush1.msra.mxu0 %v1507
    %v1509 = vand.u32 %v242, 4294901760
    %1510 = vmatprep.subr.mxu0 %v1509
    %v1511 = vand.u32 %v241, 4294901760
    %1512 = vmatpush1.msra.mxu0 %v1511
    %v1513 = vand.u32 %v244, 4294901760
    %1514 = vmatprep.subr.mxu0 %v1513
    %v1515 = vand.u32 %v243, 4294901760
    %1516 = vmatpush1.msra.mxu0 %v1515
    %v1517 = vand.u32 %v246, 4294901760
    %1518 = vmatprep.subr.mxu0 %v1517
    %v1519 = vand.u32 %v245, 4294901760
    %1520 = vmatpush1.msra.mxu0 %v1519
    %v1521 = vand.u32 %v248, 4294901760
    %1522 = vmatprep.subr.mxu0 %v1521
    %v1523 = vand.u32 %v247, 4294901760
    %1524 = vmatpush1.msra.mxu0 %v1523
    %v1525 = vand.u32 %v250, 4294901760
    %1526 = vmatprep.subr.mxu0 %v1525
    %v1527 = vand.u32 %v249, 4294901760
    %1528 = vmatpush1.msra.mxu0 %v1527
    %v1529 = vand.u32 %v252, 4294901760
    %1530 = vmatprep.subr.mxu0 %v1529
    %v1531 = vand.u32 %v251, 4294901760
    %1532 = vmatpush1.msra.mxu0 %v1531
    %v1533 = vand.u32 %v254, 4294901760
    %1534 = vmatprep.subr.mxu0 %v1533
    %v1535 = vand.u32 %v253, 4294901760
    %1536 = vmatpush1.msra.mxu0 %v1535
    %v1537 = vand.u32 %v256, 4294901760
    %1538 = vmatprep.subr.mxu0 %v1537
    %v1539 = vand.u32 %v255, 4294901760
    %1540 = vmatpush1.msra.mxu0 %v1539
    %v1541 = vand.u32 %v263, 4294901760
    %1542 = vmatprep.mubr.f32.mxu0 %v1541
    %v1543 = vand.u32 %v262, 4294901760
    %1544 = vmatmul.mubr.f32.gmra.mrb[0].mxu0 %v1543
    %v1545 = vpop.f32.mrb[0].mxu0
    %v1546 = vadd.f32 %v1409, %v1545
    %v1547 = vpop.f32.mrb[0].mxu0
    %v1548 = vadd.f32 %v1411, %v1547
    %1549 = vdwg.mxu0
    %v1554 = vsel %vm261, %v89, %v75
    %v1555 = vsel %vm261, %v96, %v82
    %v1558 = vand.u32 %v130, 4294901760
    %1559 = vmatprep.subr.mxu0 %v1558
    %v1560 = vand.u32 %v129, 4294901760
    %1561 = vmatpush1.msra.mxu0 %v1560
    %v1562 = vand.u32 %v132, 4294901760
    %1563 = vmatprep.subr.mxu0 %v1562
    %v1564 = vand.u32 %v131, 4294901760
    %1565 = vmatpush1.msra.mxu0 %v1564
    %v1566 = vand.u32 %v134, 4294901760
    %1567 = vmatprep.subr.mxu0 %v1566
    %v1568 = vand.u32 %v133, 4294901760
    %1569 = vmatpush1.msra.mxu0 %v1568
    %v1570 = vand.u32 %v136, 4294901760
    %1571 = vmatprep.subr.mxu0 %v1570
    %v1572 = vand.u32 %v135, 4294901760
    %1573 = vmatpush1.msra.mxu0 %v1572
    %v1574 = vand.u32 %v138, 4294901760
    %1575 = vmatprep.subr.mxu0 %v1574
    %v1576 = vand.u32 %v137, 4294901760
    %1577 = vmatpush1.msra.mxu0 %v1576
    %v1578 = vand.u32 %v140, 4294901760
    %1579 = vmatprep.subr.mxu0 %v1578
    %v1580 = vand.u32 %v139, 4294901760
    %1581 = vmatpush1.msra.mxu0 %v1580
    %v1582 = vand.u32 %v142, 4294901760
    %1583 = vmatprep.subr.mxu0 %v1582
    %v1584 = vand.u32 %v141, 4294901760
    %1585 = vmatpush1.msra.mxu0 %v1584
    %v1586 = vand.u32 %v144, 4294901760
    %1587 = vmatprep.subr.mxu0 %v1586
    %v1588 = vand.u32 %v143, 4294901760
    %1589 = vmatpush1.msra.mxu0 %v1588
    %v1590 = vand.u32 %v146, 4294901760
    %1591 = vmatprep.subr.mxu0 %v1590
    %v1592 = vand.u32 %v145, 4294901760
    %1593 = vmatpush1.msra.mxu0 %v1592
    %v1594 = vand.u32 %v148, 4294901760
    %1595 = vmatprep.subr.mxu0 %v1594
    %v1596 = vand.u32 %v147, 4294901760
    %1597 = vmatpush1.msra.mxu0 %v1596
    %v1598 = vand.u32 %v150, 4294901760
    %1599 = vmatprep.subr.mxu0 %v1598
    %v1600 = vand.u32 %v149, 4294901760
    %1601 = vmatpush1.msra.mxu0 %v1600
    %v1602 = vand.u32 %v152, 4294901760
    %1603 = vmatprep.subr.mxu0 %v1602
    %v1604 = vand.u32 %v151, 4294901760
    %1605 = vmatpush1.msra.mxu0 %v1604
    %v1606 = vand.u32 %v154, 4294901760
    %1607 = vmatprep.subr.mxu0 %v1606
    %v1608 = vand.u32 %v153, 4294901760
    %1609 = vmatpush1.msra.mxu0 %v1608
    %v1610 = vand.u32 %v156, 4294901760
    %1611 = vmatprep.subr.mxu0 %v1610
    %v1612 = vand.u32 %v155, 4294901760
    %1613 = vmatpush1.msra.mxu0 %v1612
    %v1614 = vand.u32 %v158, 4294901760
    %1615 = vmatprep.subr.mxu0 %v1614
    %v1616 = vand.u32 %v157, 4294901760
    %1617 = vmatpush1.msra.mxu0 %v1616
    %v1618 = vand.u32 %v160, 4294901760
    %1619 = vmatprep.subr.mxu0 %v1618
    %v1620 = vand.u32 %v159, 4294901760
    %1621 = vmatpush1.msra.mxu0 %v1620
    %v1622 = vand.u32 %v162, 4294901760
    %1623 = vmatprep.subr.mxu0 %v1622
    %v1624 = vand.u32 %v161, 4294901760
    %1625 = vmatpush1.msra.mxu0 %v1624
    %v1626 = vand.u32 %v164, 4294901760
    %1627 = vmatprep.subr.mxu0 %v1626
    %v1628 = vand.u32 %v163, 4294901760
    %1629 = vmatpush1.msra.mxu0 %v1628
    %v1630 = vand.u32 %v166, 4294901760
    %1631 = vmatprep.subr.mxu0 %v1630
    %v1632 = vand.u32 %v165, 4294901760
    %1633 = vmatpush1.msra.mxu0 %v1632
    %v1634 = vand.u32 %v168, 4294901760
    %1635 = vmatprep.subr.mxu0 %v1634
    %v1636 = vand.u32 %v167, 4294901760
    %1637 = vmatpush1.msra.mxu0 %v1636
    %v1638 = vand.u32 %v170, 4294901760
    %1639 = vmatprep.subr.mxu0 %v1638
    %v1640 = vand.u32 %v169, 4294901760
    %1641 = vmatpush1.msra.mxu0 %v1640
    %v1642 = vand.u32 %v172, 4294901760
    %1643 = vmatprep.subr.mxu0 %v1642
    %v1644 = vand.u32 %v171, 4294901760
    %1645 = vmatpush1.msra.mxu0 %v1644
    %v1646 = vand.u32 %v174, 4294901760
    %1647 = vmatprep.subr.mxu0 %v1646
    %v1648 = vand.u32 %v173, 4294901760
    %1649 = vmatpush1.msra.mxu0 %v1648
    %v1650 = vand.u32 %v176, 4294901760
    %1651 = vmatprep.subr.mxu0 %v1650
    %v1652 = vand.u32 %v175, 4294901760
    %1653 = vmatpush1.msra.mxu0 %v1652
    %v1654 = vand.u32 %v178, 4294901760
    %1655 = vmatprep.subr.mxu0 %v1654
    %v1656 = vand.u32 %v177, 4294901760
    %1657 = vmatpush1.msra.mxu0 %v1656
    %v1658 = vand.u32 %v180, 4294901760
    %1659 = vmatprep.subr.mxu0 %v1658
    %v1660 = vand.u32 %v179, 4294901760
    %1661 = vmatpush1.msra.mxu0 %v1660
    %v1662 = vand.u32 %v182, 4294901760
    %1663 = vmatprep.subr.mxu0 %v1662
    %v1664 = vand.u32 %v181, 4294901760
    %1665 = vmatpush1.msra.mxu0 %v1664
    %v1666 = vand.u32 %v184, 4294901760
    %1667 = vmatprep.subr.mxu0 %v1666
    %v1668 = vand.u32 %v183, 4294901760
    %1669 = vmatpush1.msra.mxu0 %v1668
    %v1670 = vand.u32 %v186, 4294901760
    %1671 = vmatprep.subr.mxu0 %v1670
    %v1672 = vand.u32 %v185, 4294901760
    %1673 = vmatpush1.msra.mxu0 %v1672
    %v1674 = vand.u32 %v188, 4294901760
    %1675 = vmatprep.subr.mxu0 %v1674
    %v1676 = vand.u32 %v187, 4294901760
    %1677 = vmatpush1.msra.mxu0 %v1676
    %v1678 = vand.u32 %v190, 4294901760
    %1679 = vmatprep.subr.mxu0 %v1678
    %v1680 = vand.u32 %v189, 4294901760
    %1681 = vmatpush1.msra.mxu0 %v1680
    %v1682 = vand.u32 %v192, 4294901760
    %1683 = vmatprep.subr.mxu0 %v1682
    %v1684 = vand.u32 %v191, 4294901760
    %1685 = vmatpush1.msra.mxu0 %v1684
    %v1686 = vand.u32 %v1555, 4294901760
    %v1687 = vsub.f32 %v1555, %v1686
    %v1688 = vand.u32 %v1687, 4294901760
    %v1689 = vsub.f32 %v1687, %v1688
    %v1690 = vand.u32 %v1689, 4294901760
    %1691 = vmatprep.mubr.f32.mxu0 %v1690
    %v1692 = vand.u32 %v1554, 4294901760
    %v1693 = vsub.f32 %v1554, %v1692
    %v1694 = vand.u32 %v1693, 4294901760
    %v1695 = vsub.f32 %v1693, %v1694
    %v1696 = vand.u32 %v1695, 4294901760
    %1697 = vmatmul.mubr.f32.gmra.mrb[0].mxu0 %v1696
    %v1698 = vpop.f32.mrb[0].mxu0
    %v1699 = vadd.f32 %v1546, %v1698
    %v1700 = vpop.f32.mrb[0].mxu0
    %v1701 = vadd.f32 %v1548, %v1700
    %1702 = vdwg.mxu0
    %v1703 = vand.u32 %v130, 4294901760
    %v1704 = vsub.f32 %v130, %v1703
    %v1705 = vand.u32 %v1704, 4294901760
    %v1706 = vsub.f32 %v1704, %v1705
    %v1707 = vand.u32 %v1706, 4294901760
    %1708 = vmatprep.subr.mxu0 %v1707
    %v1709 = vand.u32 %v129, 4294901760
    %v1710 = vsub.f32 %v129, %v1709
    %v1711 = vand.u32 %v1710, 4294901760
    %v1712 = vsub.f32 %v1710, %v1711
    %v1713 = vand.u32 %v1712, 4294901760
    %1714 = vmatpush1.msra.mxu0 %v1713
    %v1715 = vand.u32 %v132, 4294901760
    %v1716 = vsub.f32 %v132, %v1715
    %v1717 = vand.u32 %v1716, 4294901760
    %v1718 = vsub.f32 %v1716, %v1717
    %v1719 = vand.u32 %v1718, 4294901760
    %1720 = vmatprep.subr.mxu0 %v1719
    %v1721 = vand.u32 %v131, 4294901760
    %v1722 = vsub.f32 %v131, %v1721
    %v1723 = vand.u32 %v1722, 4294901760
    %v1724 = vsub.f32 %v1722, %v1723
    %v1725 = vand.u32 %v1724, 4294901760
    %1726 = vmatpush1.msra.mxu0 %v1725
    %v1727 = vand.u32 %v134, 4294901760
    %v1728 = vsub.f32 %v134, %v1727
    %v1729 = vand.u32 %v1728, 4294901760
    %v1730 = vsub.f32 %v1728, %v1729
    %v1731 = vand.u32 %v1730, 4294901760
    %1732 = vmatprep.subr.mxu0 %v1731
    %v1733 = vand.u32 %v133, 4294901760
    %v1734 = vsub.f32 %v133, %v1733
    %v1735 = vand.u32 %v1734, 4294901760
    %v1736 = vsub.f32 %v1734, %v1735
    %v1737 = vand.u32 %v1736, 4294901760
    %1738 = vmatpush1.msra.mxu0 %v1737
    %v1739 = vand.u32 %v136, 4294901760
    %v1740 = vsub.f32 %v136, %v1739
    %v1741 = vand.u32 %v1740, 4294901760
    %v1742 = vsub.f32 %v1740, %v1741
    %v1743 = vand.u32 %v1742, 4294901760
    %1744 = vmatprep.subr.mxu0 %v1743
    %v1745 = vand.u32 %v135, 4294901760
    %v1746 = vsub.f32 %v135, %v1745
    %v1747 = vand.u32 %v1746, 4294901760
    %v1748 = vsub.f32 %v1746, %v1747
    %v1749 = vand.u32 %v1748, 4294901760
    %1750 = vmatpush1.msra.mxu0 %v1749
    %v1751 = vand.u32 %v138, 4294901760
    %v1752 = vsub.f32 %v138, %v1751
    %v1753 = vand.u32 %v1752, 4294901760
    %v1754 = vsub.f32 %v1752, %v1753
    %v1755 = vand.u32 %v1754, 4294901760
    %1756 = vmatprep.subr.mxu0 %v1755
    %v1757 = vand.u32 %v137, 4294901760
    %v1758 = vsub.f32 %v137, %v1757
    %v1759 = vand.u32 %v1758, 4294901760
    %v1760 = vsub.f32 %v1758, %v1759
    %v1761 = vand.u32 %v1760, 4294901760
    %1762 = vmatpush1.msra.mxu0 %v1761
    %v1763 = vand.u32 %v140, 4294901760
    %v1764 = vsub.f32 %v140, %v1763
    %v1765 = vand.u32 %v1764, 4294901760
    %v1766 = vsub.f32 %v1764, %v1765
    %v1767 = vand.u32 %v1766, 4294901760
    %1768 = vmatprep.subr.mxu0 %v1767
    %v1769 = vand.u32 %v139, 4294901760
    %v1770 = vsub.f32 %v139, %v1769
    %v1771 = vand.u32 %v1770, 4294901760
    %v1772 = vsub.f32 %v1770, %v1771
    %v1773 = vand.u32 %v1772, 4294901760
    %1774 = vmatpush1.msra.mxu0 %v1773
    %v1775 = vand.u32 %v142, 4294901760
    %v1776 = vsub.f32 %v142, %v1775
    %v1777 = vand.u32 %v1776, 4294901760
    %v1778 = vsub.f32 %v1776, %v1777
    %v1779 = vand.u32 %v1778, 4294901760
    %1780 = vmatprep.subr.mxu0 %v1779
    %v1781 = vand.u32 %v141, 4294901760
    %v1782 = vsub.f32 %v141, %v1781
    %v1783 = vand.u32 %v1782, 4294901760
    %v1784 = vsub.f32 %v1782, %v1783
    %v1785 = vand.u32 %v1784, 4294901760
    %1786 = vmatpush1.msra.mxu0 %v1785
    %v1787 = vand.u32 %v144, 4294901760
    %v1788 = vsub.f32 %v144, %v1787
    %v1789 = vand.u32 %v1788, 4294901760
    %v1790 = vsub.f32 %v1788, %v1789
    %v1791 = vand.u32 %v1790, 4294901760
    %1792 = vmatprep.subr.mxu0 %v1791
    %v1793 = vand.u32 %v143, 4294901760
    %v1794 = vsub.f32 %v143, %v1793
    %v1795 = vand.u32 %v1794, 4294901760
    %v1796 = vsub.f32 %v1794, %v1795
    %v1797 = vand.u32 %v1796, 4294901760
    %1798 = vmatpush1.msra.mxu0 %v1797
    %v1799 = vand.u32 %v146, 4294901760
    %v1800 = vsub.f32 %v146, %v1799
    %v1801 = vand.u32 %v1800, 4294901760
    %v1802 = vsub.f32 %v1800, %v1801
    %v1803 = vand.u32 %v1802, 4294901760
    %1804 = vmatprep.subr.mxu0 %v1803
    %v1805 = vand.u32 %v145, 4294901760
    %v1806 = vsub.f32 %v145, %v1805
    %v1807 = vand.u32 %v1806, 4294901760
    %v1808 = vsub.f32 %v1806, %v1807
    %v1809 = vand.u32 %v1808, 4294901760
    %1810 = vmatpush1.msra.mxu0 %v1809
    %v1811 = vand.u32 %v148, 4294901760
    %v1812 = vsub.f32 %v148, %v1811
    %v1813 = vand.u32 %v1812, 4294901760
    %v1814 = vsub.f32 %v1812, %v1813
    %v1815 = vand.u32 %v1814, 4294901760
    %1816 = vmatprep.subr.mxu0 %v1815
    %v1817 = vand.u32 %v147, 4294901760
    %v1818 = vsub.f32 %v147, %v1817
    %v1819 = vand.u32 %v1818, 4294901760
    %v1820 = vsub.f32 %v1818, %v1819
    %v1821 = vand.u32 %v1820, 4294901760
    %1822 = vmatpush1.msra.mxu0 %v1821
    %v1823 = vand.u32 %v150, 4294901760
    %v1824 = vsub.f32 %v150, %v1823
    %v1825 = vand.u32 %v1824, 4294901760
    %v1826 = vsub.f32 %v1824, %v1825
    %v1827 = vand.u32 %v1826, 4294901760
    %1828 = vmatprep.subr.mxu0 %v1827
    %v1829 = vand.u32 %v149, 4294901760
    %v1830 = vsub.f32 %v149, %v1829
    %v1831 = vand.u32 %v1830, 4294901760
    %v1832 = vsub.f32 %v1830, %v1831
    %v1833 = vand.u32 %v1832, 4294901760
    %1834 = vmatpush1.msra.mxu0 %v1833
    %v1835 = vand.u32 %v152, 4294901760
    %v1836 = vsub.f32 %v152, %v1835
    %v1837 = vand.u32 %v1836, 4294901760
    %v1838 = vsub.f32 %v1836, %v1837
    %v1839 = vand.u32 %v1838, 4294901760
    %1840 = vmatprep.subr.mxu0 %v1839
    %v1841 = vand.u32 %v151, 4294901760
    %v1842 = vsub.f32 %v151, %v1841
    %v1843 = vand.u32 %v1842, 4294901760
    %v1844 = vsub.f32 %v1842, %v1843
    %v1845 = vand.u32 %v1844, 4294901760
    %1846 = vmatpush1.msra.mxu0 %v1845
    %v1847 = vand.u32 %v154, 4294901760
    %v1848 = vsub.f32 %v154, %v1847
    %v1849 = vand.u32 %v1848, 4294901760
    %v1850 = vsub.f32 %v1848, %v1849
    %v1851 = vand.u32 %v1850, 4294901760
    %1852 = vmatprep.subr.mxu0 %v1851
    %v1853 = vand.u32 %v153, 4294901760
    %v1854 = vsub.f32 %v153, %v1853
    %v1855 = vand.u32 %v1854, 4294901760
    %v1856 = vsub.f32 %v1854, %v1855
    %v1857 = vand.u32 %v1856, 4294901760
    %1858 = vmatpush1.msra.mxu0 %v1857
    %v1859 = vand.u32 %v156, 4294901760
    %v1860 = vsub.f32 %v156, %v1859
    %v1861 = vand.u32 %v1860, 4294901760
    %v1862 = vsub.f32 %v1860, %v1861
    %v1863 = vand.u32 %v1862, 4294901760
    %1864 = vmatprep.subr.mxu0 %v1863
    %v1865 = vand.u32 %v155, 4294901760
    %v1866 = vsub.f32 %v155, %v1865
    %v1867 = vand.u32 %v1866, 4294901760
    %v1868 = vsub.f32 %v1866, %v1867
    %v1869 = vand.u32 %v1868, 4294901760
    %1870 = vmatpush1.msra.mxu0 %v1869
    %v1871 = vand.u32 %v158, 4294901760
    %v1872 = vsub.f32 %v158, %v1871
    %v1873 = vand.u32 %v1872, 4294901760
    %v1874 = vsub.f32 %v1872, %v1873
    %v1875 = vand.u32 %v1874, 4294901760
    %1876 = vmatprep.subr.mxu0 %v1875
    %v1877 = vand.u32 %v157, 4294901760
    %v1878 = vsub.f32 %v157, %v1877
    %v1879 = vand.u32 %v1878, 4294901760
    %v1880 = vsub.f32 %v1878, %v1879
    %v1881 = vand.u32 %v1880, 4294901760
    %1882 = vmatpush1.msra.mxu0 %v1881
    %v1883 = vand.u32 %v160, 4294901760
    %v1884 = vsub.f32 %v160, %v1883
    %v1885 = vand.u32 %v1884, 4294901760
    %v1886 = vsub.f32 %v1884, %v1885
    %v1887 = vand.u32 %v1886, 4294901760
    %1888 = vmatprep.subr.mxu0 %v1887
    %v1889 = vand.u32 %v159, 4294901760
    %v1890 = vsub.f32 %v159, %v1889
    %v1891 = vand.u32 %v1890, 4294901760
    %v1892 = vsub.f32 %v1890, %v1891
    %v1893 = vand.u32 %v1892, 4294901760
    %1894 = vmatpush1.msra.mxu0 %v1893
    %v1895 = vand.u32 %v162, 4294901760
    %v1896 = vsub.f32 %v162, %v1895
    %v1897 = vand.u32 %v1896, 4294901760
    %v1898 = vsub.f32 %v1896, %v1897
    %v1899 = vand.u32 %v1898, 4294901760
    %1900 = vmatprep.subr.mxu0 %v1899
    %v1901 = vand.u32 %v161, 4294901760
    %v1902 = vsub.f32 %v161, %v1901
    %v1903 = vand.u32 %v1902, 4294901760
    %v1904 = vsub.f32 %v1902, %v1903
    %v1905 = vand.u32 %v1904, 4294901760
    %1906 = vmatpush1.msra.mxu0 %v1905
    %v1907 = vand.u32 %v164, 4294901760
    %v1908 = vsub.f32 %v164, %v1907
    %v1909 = vand.u32 %v1908, 4294901760
    %v1910 = vsub.f32 %v1908, %v1909
    %v1911 = vand.u32 %v1910, 4294901760
    %1912 = vmatprep.subr.mxu0 %v1911
    %v1913 = vand.u32 %v163, 4294901760
    %v1914 = vsub.f32 %v163, %v1913
    %v1915 = vand.u32 %v1914, 4294901760
    %v1916 = vsub.f32 %v1914, %v1915
    %v1917 = vand.u32 %v1916, 4294901760
    %1918 = vmatpush1.msra.mxu0 %v1917
    %v1919 = vand.u32 %v166, 4294901760
    %v1920 = vsub.f32 %v166, %v1919
    %v1921 = vand.u32 %v1920, 4294901760
    %v1922 = vsub.f32 %v1920, %v1921
    %v1923 = vand.u32 %v1922, 4294901760
    %1924 = vmatprep.subr.mxu0 %v1923
    %v1925 = vand.u32 %v165, 4294901760
    %v1926 = vsub.f32 %v165, %v1925
    %v1927 = vand.u32 %v1926, 4294901760
    %v1928 = vsub.f32 %v1926, %v1927
    %v1929 = vand.u32 %v1928, 4294901760
    %1930 = vmatpush1.msra.mxu0 %v1929
    %v1931 = vand.u32 %v168, 4294901760
    %v1932 = vsub.f32 %v168, %v1931
    %v1933 = vand.u32 %v1932, 4294901760
    %v1934 = vsub.f32 %v1932, %v1933
    %v1935 = vand.u32 %v1934, 4294901760
    %1936 = vmatprep.subr.mxu0 %v1935
    %v1937 = vand.u32 %v167, 4294901760
    %v1938 = vsub.f32 %v167, %v1937
    %v1939 = vand.u32 %v1938, 4294901760
    %v1940 = vsub.f32 %v1938, %v1939
    %v1941 = vand.u32 %v1940, 4294901760
    %1942 = vmatpush1.msra.mxu0 %v1941
    %v1943 = vand.u32 %v170, 4294901760
    %v1944 = vsub.f32 %v170, %v1943
    %v1945 = vand.u32 %v1944, 4294901760
    %v1946 = vsub.f32 %v1944, %v1945
    %v1947 = vand.u32 %v1946, 4294901760
    %1948 = vmatprep.subr.mxu0 %v1947
    %v1949 = vand.u32 %v169, 4294901760
    %v1950 = vsub.f32 %v169, %v1949
    %v1951 = vand.u32 %v1950, 4294901760
    %v1952 = vsub.f32 %v1950, %v1951
    %v1953 = vand.u32 %v1952, 4294901760
    %1954 = vmatpush1.msra.mxu0 %v1953
    %v1955 = vand.u32 %v172, 4294901760
    %v1956 = vsub.f32 %v172, %v1955
    %v1957 = vand.u32 %v1956, 4294901760
    %v1958 = vsub.f32 %v1956, %v1957
    %v1959 = vand.u32 %v1958, 4294901760
    %1960 = vmatprep.subr.mxu0 %v1959
    %v1961 = vand.u32 %v171, 4294901760
    %v1962 = vsub.f32 %v171, %v1961
    %v1963 = vand.u32 %v1962, 4294901760
    %v1964 = vsub.f32 %v1962, %v1963
    %v1965 = vand.u32 %v1964, 4294901760
    %1966 = vmatpush1.msra.mxu0 %v1965
    %v1967 = vand.u32 %v174, 4294901760
    %v1968 = vsub.f32 %v174, %v1967
    %v1969 = vand.u32 %v1968, 4294901760
    %v1970 = vsub.f32 %v1968, %v1969
    %v1971 = vand.u32 %v1970, 4294901760
    %1972 = vmatprep.subr.mxu0 %v1971
    %v1973 = vand.u32 %v173, 4294901760
    %v1974 = vsub.f32 %v173, %v1973
    %v1975 = vand.u32 %v1974, 4294901760
    %v1976 = vsub.f32 %v1974, %v1975
    %v1977 = vand.u32 %v1976, 4294901760
    %1978 = vmatpush1.msra.mxu0 %v1977
    %v1979 = vand.u32 %v176, 4294901760
    %v1980 = vsub.f32 %v176, %v1979
    %v1981 = vand.u32 %v1980, 4294901760
    %v1982 = vsub.f32 %v1980, %v1981
    %v1983 = vand.u32 %v1982, 4294901760
    %1984 = vmatprep.subr.mxu0 %v1983
    %v1985 = vand.u32 %v175, 4294901760
    %v1986 = vsub.f32 %v175, %v1985
    %v1987 = vand.u32 %v1986, 4294901760
    %v1988 = vsub.f32 %v1986, %v1987
    %v1989 = vand.u32 %v1988, 4294901760
    %1990 = vmatpush1.msra.mxu0 %v1989
    %v1991 = vand.u32 %v178, 4294901760
    %v1992 = vsub.f32 %v178, %v1991
    %v1993 = vand.u32 %v1992, 4294901760
    %v1994 = vsub.f32 %v1992, %v1993
    %v1995 = vand.u32 %v1994, 4294901760
    %1996 = vmatprep.subr.mxu0 %v1995
    %v1997 = vand.u32 %v177, 4294901760
    %v1998 = vsub.f32 %v177, %v1997
    %v1999 = vand.u32 %v1998, 4294901760
    %v2000 = vsub.f32 %v1998, %v1999
    %v2001 = vand.u32 %v2000, 4294901760
    %2002 = vmatpush1.msra.mxu0 %v2001
    %v2003 = vand.u32 %v180, 4294901760
    %v2004 = vsub.f32 %v180, %v2003
    %v2005 = vand.u32 %v2004, 4294901760
    %v2006 = vsub.f32 %v2004, %v2005
    %v2007 = vand.u32 %v2006, 4294901760
    %2008 = vmatprep.subr.mxu0 %v2007
    %v2009 = vand.u32 %v179, 4294901760
    %v2010 = vsub.f32 %v179, %v2009
    %v2011 = vand.u32 %v2010, 4294901760
    %v2012 = vsub.f32 %v2010, %v2011
    %v2013 = vand.u32 %v2012, 4294901760
    %2014 = vmatpush1.msra.mxu0 %v2013
    %v2015 = vand.u32 %v182, 4294901760
    %v2016 = vsub.f32 %v182, %v2015
    %v2017 = vand.u32 %v2016, 4294901760
    %v2018 = vsub.f32 %v2016, %v2017
    %v2019 = vand.u32 %v2018, 4294901760
    %2020 = vmatprep.subr.mxu0 %v2019
    %v2021 = vand.u32 %v181, 4294901760
    %v2022 = vsub.f32 %v181, %v2021
    %v2023 = vand.u32 %v2022, 4294901760
    %v2024 = vsub.f32 %v2022, %v2023
    %v2025 = vand.u32 %v2024, 4294901760
    %2026 = vmatpush1.msra.mxu0 %v2025
    %v2027 = vand.u32 %v184, 4294901760
    %v2028 = vsub.f32 %v184, %v2027
    %v2029 = vand.u32 %v2028, 4294901760
    %v2030 = vsub.f32 %v2028, %v2029
    %v2031 = vand.u32 %v2030, 4294901760
    %2032 = vmatprep.subr.mxu0 %v2031
    %v2033 = vand.u32 %v183, 4294901760
    %v2034 = vsub.f32 %v183, %v2033
    %v2035 = vand.u32 %v2034, 4294901760
    %v2036 = vsub.f32 %v2034, %v2035
    %v2037 = vand.u32 %v2036, 4294901760
    %2038 = vmatpush1.msra.mxu0 %v2037
    %v2039 = vand.u32 %v186, 4294901760
    %v2040 = vsub.f32 %v186, %v2039
    %v2041 = vand.u32 %v2040, 4294901760
    %v2042 = vsub.f32 %v2040, %v2041
    %v2043 = vand.u32 %v2042, 4294901760
    %2044 = vmatprep.subr.mxu0 %v2043
    %v2045 = vand.u32 %v185, 4294901760
    %v2046 = vsub.f32 %v185, %v2045
    %v2047 = vand.u32 %v2046, 4294901760
    %v2048 = vsub.f32 %v2046, %v2047
    %v2049 = vand.u32 %v2048, 4294901760
    %2050 = vmatpush1.msra.mxu0 %v2049
    %v2051 = vand.u32 %v188, 4294901760
    %v2052 = vsub.f32 %v188, %v2051
    %v2053 = vand.u32 %v2052, 4294901760
    %v2054 = vsub.f32 %v2052, %v2053
    %v2055 = vand.u32 %v2054, 4294901760
    %2056 = vmatprep.subr.mxu0 %v2055
    %v2057 = vand.u32 %v187, 4294901760
    %v2058 = vsub.f32 %v187, %v2057
    %v2059 = vand.u32 %v2058, 4294901760
    %v2060 = vsub.f32 %v2058, %v2059
    %v2061 = vand.u32 %v2060, 4294901760
    %2062 = vmatpush1.msra.mxu0 %v2061
    %v2063 = vand.u32 %v190, 4294901760
    %v2064 = vsub.f32 %v190, %v2063
    %v2065 = vand.u32 %v2064, 4294901760
    %v2066 = vsub.f32 %v2064, %v2065
    %v2067 = vand.u32 %v2066, 4294901760
    %2068 = vmatprep.subr.mxu0 %v2067
    %v2069 = vand.u32 %v189, 4294901760
    %v2070 = vsub.f32 %v189, %v2069
    %v2071 = vand.u32 %v2070, 4294901760
    %v2072 = vsub.f32 %v2070, %v2071
    %v2073 = vand.u32 %v2072, 4294901760
    %2074 = vmatpush1.msra.mxu0 %v2073
    %v2075 = vand.u32 %v192, 4294901760
    %v2076 = vsub.f32 %v192, %v2075
    %v2077 = vand.u32 %v2076, 4294901760
    %v2078 = vsub.f32 %v2076, %v2077
    %v2079 = vand.u32 %v2078, 4294901760
    %2080 = vmatprep.subr.mxu0 %v2079
    %v2081 = vand.u32 %v191, 4294901760
    %v2082 = vsub.f32 %v191, %v2081
    %v2083 = vand.u32 %v2082, 4294901760
    %v2084 = vsub.f32 %v2082, %v2083
    %v2085 = vand.u32 %v2084, 4294901760
    %2086 = vmatpush1.msra.mxu0 %v2085
    %v2087 = vand.u32 %v1555, 4294901760
    %2088 = vmatprep.mubr.f32.mxu0 %v2087
    %v2089 = vand.u32 %v1554, 4294901760
    %2090 = vmatmul.mubr.f32.gmra.mrb[0].mxu0 %v2089
    %v2091 = vpop.f32.mrb[0].mxu0
    %v2092 = vadd.f32 %v1699, %v2091
    %v2093 = vpop.f32.mrb[0].mxu0
    %v2094 = vadd.f32 %v1701, %v2093
    %2095 = vdwg.mxu0
    %v2096 = vand.u32 %v130, 4294901760
    %v2097 = vsub.f32 %v130, %v2096
    %2098 = vmatprep.subr.mxu0 %v2097
    %v2099 = vand.u32 %v129, 4294901760
    %v2100 = vsub.f32 %v129, %v2099
    %2101 = vmatpush1.msra.mxu0 %v2100
    %v2102 = vand.u32 %v132, 4294901760
    %v2103 = vsub.f32 %v132, %v2102
    %2104 = vmatprep.subr.mxu0 %v2103
    %v2105 = vand.u32 %v131, 4294901760
    %v2106 = vsub.f32 %v131, %v2105
    %2107 = vmatpush1.msra.mxu0 %v2106
    %v2108 = vand.u32 %v134, 4294901760
    %v2109 = vsub.f32 %v134, %v2108
    %2110 = vmatprep.subr.mxu0 %v2109
    %v2111 = vand.u32 %v133, 4294901760
    %v2112 = vsub.f32 %v133, %v2111
    %2113 = vmatpush1.msra.mxu0 %v2112
    %v2114 = vand.u32 %v136, 4294901760
    %v2115 = vsub.f32 %v136, %v2114
    %2116 = vmatprep.subr.mxu0 %v2115
    %v2117 = vand.u32 %v135, 4294901760
    %v2118 = vsub.f32 %v135, %v2117
    %2119 = vmatpush1.msra.mxu0 %v2118
    %v2120 = vand.u32 %v138, 4294901760
    %v2121 = vsub.f32 %v138, %v2120
    %2122 = vmatprep.subr.mxu0 %v2121
    %v2123 = vand.u32 %v137, 4294901760
    %v2124 = vsub.f32 %v137, %v2123
    %2125 = vmatpush1.msra.mxu0 %v2124
    %v2126 = vand.u32 %v140, 4294901760
    %v2127 = vsub.f32 %v140, %v2126
    %2128 = vmatprep.subr.mxu0 %v2127
    %v2129 = vand.u32 %v139, 4294901760
    %v2130 = vsub.f32 %v139, %v2129
    %2131 = vmatpush1.msra.mxu0 %v2130
    %v2132 = vand.u32 %v142, 4294901760
    %v2133 = vsub.f32 %v142, %v2132
    %2134 = vmatprep.subr.mxu0 %v2133
    %v2135 = vand.u32 %v141, 4294901760
    %v2136 = vsub.f32 %v141, %v2135
    %2137 = vmatpush1.msra.mxu0 %v2136
    %v2138 = vand.u32 %v144, 4294901760
    %v2139 = vsub.f32 %v144, %v2138
    %2140 = vmatprep.subr.mxu0 %v2139
    %v2141 = vand.u32 %v143, 4294901760
    %v2142 = vsub.f32 %v143, %v2141
    %2143 = vmatpush1.msra.mxu0 %v2142
    %v2144 = vand.u32 %v146, 4294901760
    %v2145 = vsub.f32 %v146, %v2144
    %2146 = vmatprep.subr.mxu0 %v2145
    %v2147 = vand.u32 %v145, 4294901760
    %v2148 = vsub.f32 %v145, %v2147
    %2149 = vmatpush1.msra.mxu0 %v2148
    %v2150 = vand.u32 %v148, 4294901760
    %v2151 = vsub.f32 %v148, %v2150
    %2152 = vmatprep.subr.mxu0 %v2151
    %v2153 = vand.u32 %v147, 4294901760
    %v2154 = vsub.f32 %v147, %v2153
    %2155 = vmatpush1.msra.mxu0 %v2154
    %v2156 = vand.u32 %v150, 4294901760
    %v2157 = vsub.f32 %v150, %v2156
    %2158 = vmatprep.subr.mxu0 %v2157
    %v2159 = vand.u32 %v149, 4294901760
    %v2160 = vsub.f32 %v149, %v2159
    %2161 = vmatpush1.msra.mxu0 %v2160
    %v2162 = vand.u32 %v152, 4294901760
    %v2163 = vsub.f32 %v152, %v2162
    %2164 = vmatprep.subr.mxu0 %v2163
    %v2165 = vand.u32 %v151, 4294901760
    %v2166 = vsub.f32 %v151, %v2165
    %2167 = vmatpush1.msra.mxu0 %v2166
    %v2168 = vand.u32 %v154, 4294901760
    %v2169 = vsub.f32 %v154, %v2168
    %2170 = vmatprep.subr.mxu0 %v2169
    %v2171 = vand.u32 %v153, 4294901760
    %v2172 = vsub.f32 %v153, %v2171
    %2173 = vmatpush1.msra.mxu0 %v2172
    %v2174 = vand.u32 %v156, 4294901760
    %v2175 = vsub.f32 %v156, %v2174
    %2176 = vmatprep.subr.mxu0 %v2175
    %v2177 = vand.u32 %v155, 4294901760
    %v2178 = vsub.f32 %v155, %v2177
    %2179 = vmatpush1.msra.mxu0 %v2178
    %v2180 = vand.u32 %v158, 4294901760
    %v2181 = vsub.f32 %v158, %v2180
    %2182 = vmatprep.subr.mxu0 %v2181
    %v2183 = vand.u32 %v157, 4294901760
    %v2184 = vsub.f32 %v157, %v2183
    %2185 = vmatpush1.msra.mxu0 %v2184
    %v2186 = vand.u32 %v160, 4294901760
    %v2187 = vsub.f32 %v160, %v2186
    %2188 = vmatprep.subr.mxu0 %v2187
    %v2189 = vand.u32 %v159, 4294901760
    %v2190 = vsub.f32 %v159, %v2189
    %2191 = vmatpush1.msra.mxu0 %v2190
    %v2192 = vand.u32 %v162, 4294901760
    %v2193 = vsub.f32 %v162, %v2192
    %2194 = vmatprep.subr.mxu0 %v2193
    %v2195 = vand.u32 %v161, 4294901760
    %v2196 = vsub.f32 %v161, %v2195
    %2197 = vmatpush1.msra.mxu0 %v2196
    %v2198 = vand.u32 %v164, 4294901760
    %v2199 = vsub.f32 %v164, %v2198
    %2200 = vmatprep.subr.mxu0 %v2199
    %v2201 = vand.u32 %v163, 4294901760
    %v2202 = vsub.f32 %v163, %v2201
    %2203 = vmatpush1.msra.mxu0 %v2202
    %v2204 = vand.u32 %v166, 4294901760
    %v2205 = vsub.f32 %v166, %v2204
    %2206 = vmatprep.subr.mxu0 %v2205
    %v2207 = vand.u32 %v165, 4294901760
    %v2208 = vsub.f32 %v165, %v2207
    %2209 = vmatpush1.msra.mxu0 %v2208
    %v2210 = vand.u32 %v168, 4294901760
    %v2211 = vsub.f32 %v168, %v2210
    %2212 = vmatprep.subr.mxu0 %v2211
    %v2213 = vand.u32 %v167, 4294901760
    %v2214 = vsub.f32 %v167, %v2213
    %2215 = vmatpush1.msra.mxu0 %v2214
    %v2216 = vand.u32 %v170, 4294901760
    %v2217 = vsub.f32 %v170, %v2216
    %2218 = vmatprep.subr.mxu0 %v2217
    %v2219 = vand.u32 %v169, 4294901760
    %v2220 = vsub.f32 %v169, %v2219
    %2221 = vmatpush1.msra.mxu0 %v2220
    %v2222 = vand.u32 %v172, 4294901760
    %v2223 = vsub.f32 %v172, %v2222
    %2224 = vmatprep.subr.mxu0 %v2223
    %v2225 = vand.u32 %v171, 4294901760
    %v2226 = vsub.f32 %v171, %v2225
    %2227 = vmatpush1.msra.mxu0 %v2226
    %v2228 = vand.u32 %v174, 4294901760
    %v2229 = vsub.f32 %v174, %v2228
    %2230 = vmatprep.subr.mxu0 %v2229
    %v2231 = vand.u32 %v173, 4294901760
    %v2232 = vsub.f32 %v173, %v2231
    %2233 = vmatpush1.msra.mxu0 %v2232
    %v2234 = vand.u32 %v176, 4294901760
    %v2235 = vsub.f32 %v176, %v2234
    %2236 = vmatprep.subr.mxu0 %v2235
    %v2237 = vand.u32 %v175, 4294901760
    %v2238 = vsub.f32 %v175, %v2237
    %2239 = vmatpush1.msra.mxu0 %v2238
    %v2240 = vand.u32 %v178, 4294901760
    %v2241 = vsub.f32 %v178, %v2240
    %2242 = vmatprep.subr.mxu0 %v2241
    %v2243 = vand.u32 %v177, 4294901760
    %v2244 = vsub.f32 %v177, %v2243
    %2245 = vmatpush1.msra.mxu0 %v2244
    %v2246 = vand.u32 %v180, 4294901760
    %v2247 = vsub.f32 %v180, %v2246
    %2248 = vmatprep.subr.mxu0 %v2247
    %v2249 = vand.u32 %v179, 4294901760
    %v2250 = vsub.f32 %v179, %v2249
    %2251 = vmatpush1.msra.mxu0 %v2250
    %v2252 = vand.u32 %v182, 4294901760
    %v2253 = vsub.f32 %v182, %v2252
    %2254 = vmatprep.subr.mxu0 %v2253
    %v2255 = vand.u32 %v181, 4294901760
    %v2256 = vsub.f32 %v181, %v2255
    %2257 = vmatpush1.msra.mxu0 %v2256
    %v2258 = vand.u32 %v184, 4294901760
    %v2259 = vsub.f32 %v184, %v2258
    %2260 = vmatprep.subr.mxu0 %v2259
    %v2261 = vand.u32 %v183, 4294901760
    %v2262 = vsub.f32 %v183, %v2261
    %2263 = vmatpush1.msra.mxu0 %v2262
    %v2264 = vand.u32 %v186, 4294901760
    %v2265 = vsub.f32 %v186, %v2264
    %2266 = vmatprep.subr.mxu0 %v2265
    %v2267 = vand.u32 %v185, 4294901760
    %v2268 = vsub.f32 %v185, %v2267
    %2269 = vmatpush1.msra.mxu0 %v2268
    %v2270 = vand.u32 %v188, 4294901760
    %v2271 = vsub.f32 %v188, %v2270
    %2272 = vmatprep.subr.mxu0 %v2271
    %v2273 = vand.u32 %v187, 4294901760
    %v2274 = vsub.f32 %v187, %v2273
    %2275 = vmatpush1.msra.mxu0 %v2274
    %v2276 = vand.u32 %v190, 4294901760
    %v2277 = vsub.f32 %v190, %v2276
    %2278 = vmatprep.subr.mxu0 %v2277
    %v2279 = vand.u32 %v189, 4294901760
    %v2280 = vsub.f32 %v189, %v2279
    %2281 = vmatpush1.msra.mxu0 %v2280
    %v2282 = vand.u32 %v192, 4294901760
    %v2283 = vsub.f32 %v192, %v2282
    %2284 = vmatprep.subr.mxu0 %v2283
    %v2285 = vand.u32 %v191, 4294901760
    %v2286 = vsub.f32 %v191, %v2285
    %2287 = vmatpush1.msra.mxu0 %v2286
    %v2288 = vand.u32 %v1555, 4294901760
    %v2289 = vsub.f32 %v1555, %v2288
    %2290 = vmatprep.mubr.f32.mxu0 %v2289
    %v2291 = vand.u32 %v1554, 4294901760
    %v2292 = vsub.f32 %v1554, %v2291
    %2293 = vmatmul.mubr.f32.gmra.mrb[0].mxu0 %v2292
    %v2294 = vpop.f32.mrb[0].mxu0
    %v2295 = vadd.f32 %v2092, %v2294
    %v2296 = vpop.f32.mrb[0].mxu0
    %v2297 = vadd.f32 %v2094, %v2296
    %2298 = vdwg.mxu0
    %v2299 = vand.u32 %v130, 4294901760
    %2300 = vmatprep.subr.mxu0 %v2299
    %v2301 = vand.u32 %v129, 4294901760
    %2302 = vmatpush1.msra.mxu0 %v2301
    %v2303 = vand.u32 %v132, 4294901760
    %2304 = vmatprep.subr.mxu0 %v2303
    %v2305 = vand.u32 %v131, 4294901760
    %2306 = vmatpush1.msra.mxu0 %v2305
    %v2307 = vand.u32 %v134, 4294901760
    %2308 = vmatprep.subr.mxu0 %v2307
    %v2309 = vand.u32 %v133, 4294901760
    %2310 = vmatpush1.msra.mxu0 %v2309
    %v2311 = vand.u32 %v136, 4294901760
    %2312 = vmatprep.subr.mxu0 %v2311
    %v2313 = vand.u32 %v135, 4294901760
    %2314 = vmatpush1.msra.mxu0 %v2313
    %v2315 = vand.u32 %v138, 4294901760
    %2316 = vmatprep.subr.mxu0 %v2315
    %v2317 = vand.u32 %v137, 4294901760
    %2318 = vmatpush1.msra.mxu0 %v2317
    %v2319 = vand.u32 %v140, 4294901760
    %2320 = vmatprep.subr.mxu0 %v2319
    %v2321 = vand.u32 %v139, 4294901760
    %2322 = vmatpush1.msra.mxu0 %v2321
    %v2323 = vand.u32 %v142, 4294901760
    %2324 = vmatprep.subr.mxu0 %v2323
    %v2325 = vand.u32 %v141, 4294901760
    %2326 = vmatpush1.msra.mxu0 %v2325
    %v2327 = vand.u32 %v144, 4294901760
    %2328 = vmatprep.subr.mxu0 %v2327
    %v2329 = vand.u32 %v143, 4294901760
    %2330 = vmatpush1.msra.mxu0 %v2329
    %v2331 = vand.u32 %v146, 4294901760
    %2332 = vmatprep.subr.mxu0 %v2331
    %v2333 = vand.u32 %v145, 4294901760
    %2334 = vmatpush1.msra.mxu0 %v2333
    %v2335 = vand.u32 %v148, 4294901760
    %2336 = vmatprep.subr.mxu0 %v2335
    %v2337 = vand.u32 %v147, 4294901760
    %2338 = vmatpush1.msra.mxu0 %v2337
    %v2339 = vand.u32 %v150, 4294901760
    %2340 = vmatprep.subr.mxu0 %v2339
    %v2341 = vand.u32 %v149, 4294901760
    %2342 = vmatpush1.msra.mxu0 %v2341
    %v2343 = vand.u32 %v152, 4294901760
    %2344 = vmatprep.subr.mxu0 %v2343
    %v2345 = vand.u32 %v151, 4294901760
    %2346 = vmatpush1.msra.mxu0 %v2345
    %v2347 = vand.u32 %v154, 4294901760
    %2348 = vmatprep.subr.mxu0 %v2347
    %v2349 = vand.u32 %v153, 4294901760
    %2350 = vmatpush1.msra.mxu0 %v2349
    %v2351 = vand.u32 %v156, 4294901760
    %2352 = vmatprep.subr.mxu0 %v2351
    %v2353 = vand.u32 %v155, 4294901760
    %2354 = vmatpush1.msra.mxu0 %v2353
    %v2355 = vand.u32 %v158, 4294901760
    %2356 = vmatprep.subr.mxu0 %v2355
    %v2357 = vand.u32 %v157, 4294901760
    %2358 = vmatpush1.msra.mxu0 %v2357
    %v2359 = vand.u32 %v160, 4294901760
    %2360 = vmatprep.subr.mxu0 %v2359
    %v2361 = vand.u32 %v159, 4294901760
    %2362 = vmatpush1.msra.mxu0 %v2361
    %v2363 = vand.u32 %v162, 4294901760
    %2364 = vmatprep.subr.mxu0 %v2363
    %v2365 = vand.u32 %v161, 4294901760
    %2366 = vmatpush1.msra.mxu0 %v2365
    %v2367 = vand.u32 %v164, 4294901760
    %2368 = vmatprep.subr.mxu0 %v2367
    %v2369 = vand.u32 %v163, 4294901760
    %2370 = vmatpush1.msra.mxu0 %v2369
    %v2371 = vand.u32 %v166, 4294901760
    %2372 = vmatprep.subr.mxu0 %v2371
    %v2373 = vand.u32 %v165, 4294901760
    %2374 = vmatpush1.msra.mxu0 %v2373
    %v2375 = vand.u32 %v168, 4294901760
    %2376 = vmatprep.subr.mxu0 %v2375
    %v2377 = vand.u32 %v167, 4294901760
    %2378 = vmatpush1.msra.mxu0 %v2377
    %v2379 = vand.u32 %v170, 4294901760
    %2380 = vmatprep.subr.mxu0 %v2379
    %v2381 = vand.u32 %v169, 4294901760
    %2382 = vmatpush1.msra.mxu0 %v2381
    %v2383 = vand.u32 %v172, 4294901760
    %2384 = vmatprep.subr.mxu0 %v2383
    %v2385 = vand.u32 %v171, 4294901760
    %2386 = vmatpush1.msra.mxu0 %v2385
    %v2387 = vand.u32 %v174, 4294901760
    %2388 = vmatprep.subr.mxu0 %v2387
    %v2389 = vand.u32 %v173, 4294901760
    %2390 = vmatpush1.msra.mxu0 %v2389
    %v2391 = vand.u32 %v176, 4294901760
    %2392 = vmatprep.subr.mxu0 %v2391
    %v2393 = vand.u32 %v175, 4294901760
    %2394 = vmatpush1.msra.mxu0 %v2393
    %v2395 = vand.u32 %v178, 4294901760
    %2396 = vmatprep.subr.mxu0 %v2395
    %v2397 = vand.u32 %v177, 4294901760
    %2398 = vmatpush1.msra.mxu0 %v2397
    %v2399 = vand.u32 %v180, 4294901760
    %2400 = vmatprep.subr.mxu0 %v2399
    %v2401 = vand.u32 %v179, 4294901760
    %2402 = vmatpush1.msra.mxu0 %v2401
    %v2403 = vand.u32 %v182, 4294901760
    %2404 = vmatprep.subr.mxu0 %v2403
    %v2405 = vand.u32 %v181, 4294901760
    %2406 = vmatpush1.msra.mxu0 %v2405
    %v2407 = vand.u32 %v184, 4294901760
    %2408 = vmatprep.subr.mxu0 %v2407
    %v2409 = vand.u32 %v183, 4294901760
    %2410 = vmatpush1.msra.mxu0 %v2409
    %v2411 = vand.u32 %v186, 4294901760
    %2412 = vmatprep.subr.mxu0 %v2411
    %v2413 = vand.u32 %v185, 4294901760
    %2414 = vmatpush1.msra.mxu0 %v2413
    %v2415 = vand.u32 %v188, 4294901760
    %2416 = vmatprep.subr.mxu0 %v2415
    %v2417 = vand.u32 %v187, 4294901760
    %2418 = vmatpush1.msra.mxu0 %v2417
    %v2419 = vand.u32 %v190, 4294901760
    %2420 = vmatprep.subr.mxu0 %v2419
    %v2421 = vand.u32 %v189, 4294901760
    %2422 = vmatpush1.msra.mxu0 %v2421
    %v2423 = vand.u32 %v192, 4294901760
    %2424 = vmatprep.subr.mxu0 %v2423
    %v2425 = vand.u32 %v191, 4294901760
    %2426 = vmatpush1.msra.mxu0 %v2425
    %v2427 = vand.u32 %v1555, 4294901760
    %v2428 = vsub.f32 %v1555, %v2427
    %v2429 = vand.u32 %v2428, 4294901760
    %2430 = vmatprep.mubr.f32.mxu0 %v2429
    %v2431 = vand.u32 %v1554, 4294901760
    %v2432 = vsub.f32 %v1554, %v2431
    %v2433 = vand.u32 %v2432, 4294901760
    %2434 = vmatmul.mubr.f32.gmra.mrb[0].mxu0 %v2433
    %v2435 = vpop.f32.mrb[0].mxu0
    %v2436 = vadd.f32 %v2295, %v2435
    %v2437 = vpop.f32.mrb[0].mxu0
    %v2438 = vadd.f32 %v2297, %v2437
    %2439 = vdwg.mxu0
    %v2440 = vand.u32 %v130, 4294901760
    %v2441 = vsub.f32 %v130, %v2440
    %v2442 = vand.u32 %v2441, 4294901760
    %2443 = vmatprep.subr.mxu0 %v2442
    %v2444 = vand.u32 %v129, 4294901760
    %v2445 = vsub.f32 %v129, %v2444
    %v2446 = vand.u32 %v2445, 4294901760
    %2447 = vmatpush1.msra.mxu0 %v2446
    %v2448 = vand.u32 %v132, 4294901760
    %v2449 = vsub.f32 %v132, %v2448
    %v2450 = vand.u32 %v2449, 4294901760
    %2451 = vmatprep.subr.mxu0 %v2450
    %v2452 = vand.u32 %v131, 4294901760
    %v2453 = vsub.f32 %v131, %v2452
    %v2454 = vand.u32 %v2453, 4294901760
    %2455 = vmatpush1.msra.mxu0 %v2454
    %v2456 = vand.u32 %v134, 4294901760
    %v2457 = vsub.f32 %v134, %v2456
    %v2458 = vand.u32 %v2457, 4294901760
    %2459 = vmatprep.subr.mxu0 %v2458
    %v2460 = vand.u32 %v133, 4294901760
    %v2461 = vsub.f32 %v133, %v2460
    %v2462 = vand.u32 %v2461, 4294901760
    %2463 = vmatpush1.msra.mxu0 %v2462
    %v2464 = vand.u32 %v136, 4294901760
    %v2465 = vsub.f32 %v136, %v2464
    %v2466 = vand.u32 %v2465, 4294901760
    %2467 = vmatprep.subr.mxu0 %v2466
    %v2468 = vand.u32 %v135, 4294901760
    %v2469 = vsub.f32 %v135, %v2468
    %v2470 = vand.u32 %v2469, 4294901760
    %2471 = vmatpush1.msra.mxu0 %v2470
    %v2472 = vand.u32 %v138, 4294901760
    %v2473 = vsub.f32 %v138, %v2472
    %v2474 = vand.u32 %v2473, 4294901760
    %2475 = vmatprep.subr.mxu0 %v2474
    %v2476 = vand.u32 %v137, 4294901760
    %v2477 = vsub.f32 %v137, %v2476
    %v2478 = vand.u32 %v2477, 4294901760
    %2479 = vmatpush1.msra.mxu0 %v2478
    %v2480 = vand.u32 %v140, 4294901760
    %v2481 = vsub.f32 %v140, %v2480
    %v2482 = vand.u32 %v2481, 4294901760
    %2483 = vmatprep.subr.mxu0 %v2482
    %v2484 = vand.u32 %v139, 4294901760
    %v2485 = vsub.f32 %v139, %v2484
    %v2486 = vand.u32 %v2485, 4294901760
    %2487 = vmatpush1.msra.mxu0 %v2486
    %v2488 = vand.u32 %v142, 4294901760
    %v2489 = vsub.f32 %v142, %v2488
    %v2490 = vand.u32 %v2489, 4294901760
    %2491 = vmatprep.subr.mxu0 %v2490
    %v2492 = vand.u32 %v141, 4294901760
    %v2493 = vsub.f32 %v141, %v2492
    %v2494 = vand.u32 %v2493, 4294901760
    %2495 = vmatpush1.msra.mxu0 %v2494
    %v2496 = vand.u32 %v144, 4294901760
    %v2497 = vsub.f32 %v144, %v2496
    %v2498 = vand.u32 %v2497, 4294901760
    %2499 = vmatprep.subr.mxu0 %v2498
    %v2500 = vand.u32 %v143, 4294901760
    %v2501 = vsub.f32 %v143, %v2500
    %v2502 = vand.u32 %v2501, 4294901760
    %2503 = vmatpush1.msra.mxu0 %v2502
    %v2504 = vand.u32 %v146, 4294901760
    %v2505 = vsub.f32 %v146, %v2504
    %v2506 = vand.u32 %v2505, 4294901760
    %2507 = vmatprep.subr.mxu0 %v2506
    %v2508 = vand.u32 %v145, 4294901760
    %v2509 = vsub.f32 %v145, %v2508
    %v2510 = vand.u32 %v2509, 4294901760
    %2511 = vmatpush1.msra.mxu0 %v2510
    %v2512 = vand.u32 %v148, 4294901760
    %v2513 = vsub.f32 %v148, %v2512
    %v2514 = vand.u32 %v2513, 4294901760
    %2515 = vmatprep.subr.mxu0 %v2514
    %v2516 = vand.u32 %v147, 4294901760
    %v2517 = vsub.f32 %v147, %v2516
    %v2518 = vand.u32 %v2517, 4294901760
    %2519 = vmatpush1.msra.mxu0 %v2518
    %v2520 = vand.u32 %v150, 4294901760
    %v2521 = vsub.f32 %v150, %v2520
    %v2522 = vand.u32 %v2521, 4294901760
    %2523 = vmatprep.subr.mxu0 %v2522
    %v2524 = vand.u32 %v149, 4294901760
    %v2525 = vsub.f32 %v149, %v2524
    %v2526 = vand.u32 %v2525, 4294901760
    %2527 = vmatpush1.msra.mxu0 %v2526
    %v2528 = vand.u32 %v152, 4294901760
    %v2529 = vsub.f32 %v152, %v2528
    %v2530 = vand.u32 %v2529, 4294901760
    %2531 = vmatprep.subr.mxu0 %v2530
    %v2532 = vand.u32 %v151, 4294901760
    %v2533 = vsub.f32 %v151, %v2532
    %v2534 = vand.u32 %v2533, 4294901760
    %2535 = vmatpush1.msra.mxu0 %v2534
    %v2536 = vand.u32 %v154, 4294901760
    %v2537 = vsub.f32 %v154, %v2536
    %v2538 = vand.u32 %v2537, 4294901760
    %2539 = vmatprep.subr.mxu0 %v2538
    %v2540 = vand.u32 %v153, 4294901760
    %v2541 = vsub.f32 %v153, %v2540
    %v2542 = vand.u32 %v2541, 4294901760
    %2543 = vmatpush1.msra.mxu0 %v2542
    %v2544 = vand.u32 %v156, 4294901760
    %v2545 = vsub.f32 %v156, %v2544
    %v2546 = vand.u32 %v2545, 4294901760
    %2547 = vmatprep.subr.mxu0 %v2546
    %v2548 = vand.u32 %v155, 4294901760
    %v2549 = vsub.f32 %v155, %v2548
    %v2550 = vand.u32 %v2549, 4294901760
    %2551 = vmatpush1.msra.mxu0 %v2550
    %v2552 = vand.u32 %v158, 4294901760
    %v2553 = vsub.f32 %v158, %v2552
    %v2554 = vand.u32 %v2553, 4294901760
    %2555 = vmatprep.subr.mxu0 %v2554
    %v2556 = vand.u32 %v157, 4294901760
    %v2557 = vsub.f32 %v157, %v2556
    %v2558 = vand.u32 %v2557, 4294901760
    %2559 = vmatpush1.msra.mxu0 %v2558
    %v2560 = vand.u32 %v160, 4294901760
    %v2561 = vsub.f32 %v160, %v2560
    %v2562 = vand.u32 %v2561, 4294901760
    %2563 = vmatprep.subr.mxu0 %v2562
    %v2564 = vand.u32 %v159, 4294901760
    %v2565 = vsub.f32 %v159, %v2564
    %v2566 = vand.u32 %v2565, 4294901760
    %2567 = vmatpush1.msra.mxu0 %v2566
    %v2568 = vand.u32 %v162, 4294901760
    %v2569 = vsub.f32 %v162, %v2568
    %v2570 = vand.u32 %v2569, 4294901760
    %2571 = vmatprep.subr.mxu0 %v2570
    %v2572 = vand.u32 %v161, 4294901760
    %v2573 = vsub.f32 %v161, %v2572
    %v2574 = vand.u32 %v2573, 4294901760
    %2575 = vmatpush1.msra.mxu0 %v2574
    %v2576 = vand.u32 %v164, 4294901760
    %v2577 = vsub.f32 %v164, %v2576
    %v2578 = vand.u32 %v2577, 4294901760
    %2579 = vmatprep.subr.mxu0 %v2578
    %v2580 = vand.u32 %v163, 4294901760
    %v2581 = vsub.f32 %v163, %v2580
    %v2582 = vand.u32 %v2581, 4294901760
    %2583 = vmatpush1.msra.mxu0 %v2582
    %v2584 = vand.u32 %v166, 4294901760
    %v2585 = vsub.f32 %v166, %v2584
    %v2586 = vand.u32 %v2585, 4294901760
    %2587 = vmatprep.subr.mxu0 %v2586
    %v2588 = vand.u32 %v165, 4294901760
    %v2589 = vsub.f32 %v165, %v2588
    %v2590 = vand.u32 %v2589, 4294901760
    %2591 = vmatpush1.msra.mxu0 %v2590
    %v2592 = vand.u32 %v168, 4294901760
    %v2593 = vsub.f32 %v168, %v2592
    %v2594 = vand.u32 %v2593, 4294901760
    %2595 = vmatprep.subr.mxu0 %v2594
    %v2596 = vand.u32 %v167, 4294901760
    %v2597 = vsub.f32 %v167, %v2596
    %v2598 = vand.u32 %v2597, 4294901760
    %2599 = vmatpush1.msra.mxu0 %v2598
    %v2600 = vand.u32 %v170, 4294901760
    %v2601 = vsub.f32 %v170, %v2600
    %v2602 = vand.u32 %v2601, 4294901760
    %2603 = vmatprep.subr.mxu0 %v2602
    %v2604 = vand.u32 %v169, 4294901760
    %v2605 = vsub.f32 %v169, %v2604
    %v2606 = vand.u32 %v2605, 4294901760
    %2607 = vmatpush1.msra.mxu0 %v2606
    %v2608 = vand.u32 %v172, 4294901760
    %v2609 = vsub.f32 %v172, %v2608
    %v2610 = vand.u32 %v2609, 4294901760
    %2611 = vmatprep.subr.mxu0 %v2610
    %v2612 = vand.u32 %v171, 4294901760
    %v2613 = vsub.f32 %v171, %v2612
    %v2614 = vand.u32 %v2613, 4294901760
    %2615 = vmatpush1.msra.mxu0 %v2614
    %v2616 = vand.u32 %v174, 4294901760
    %v2617 = vsub.f32 %v174, %v2616
    %v2618 = vand.u32 %v2617, 4294901760
    %2619 = vmatprep.subr.mxu0 %v2618
    %v2620 = vand.u32 %v173, 4294901760
    %v2621 = vsub.f32 %v173, %v2620
    %v2622 = vand.u32 %v2621, 4294901760
    %2623 = vmatpush1.msra.mxu0 %v2622
    %v2624 = vand.u32 %v176, 4294901760
    %v2625 = vsub.f32 %v176, %v2624
    %v2626 = vand.u32 %v2625, 4294901760
    %2627 = vmatprep.subr.mxu0 %v2626
    %v2628 = vand.u32 %v175, 4294901760
    %v2629 = vsub.f32 %v175, %v2628
    %v2630 = vand.u32 %v2629, 4294901760
    %2631 = vmatpush1.msra.mxu0 %v2630
    %v2632 = vand.u32 %v178, 4294901760
    %v2633 = vsub.f32 %v178, %v2632
    %v2634 = vand.u32 %v2633, 4294901760
    %2635 = vmatprep.subr.mxu0 %v2634
    %v2636 = vand.u32 %v177, 4294901760
    %v2637 = vsub.f32 %v177, %v2636
    %v2638 = vand.u32 %v2637, 4294901760
    %2639 = vmatpush1.msra.mxu0 %v2638
    %v2640 = vand.u32 %v180, 4294901760
    %v2641 = vsub.f32 %v180, %v2640
    %v2642 = vand.u32 %v2641, 4294901760
    %2643 = vmatprep.subr.mxu0 %v2642
    %v2644 = vand.u32 %v179, 4294901760
    %v2645 = vsub.f32 %v179, %v2644
    %v2646 = vand.u32 %v2645, 4294901760
    %2647 = vmatpush1.msra.mxu0 %v2646
    %v2648 = vand.u32 %v182, 4294901760
    %v2649 = vsub.f32 %v182, %v2648
    %v2650 = vand.u32 %v2649, 4294901760
    %2651 = vmatprep.subr.mxu0 %v2650
    %v2652 = vand.u32 %v181, 4294901760
    %v2653 = vsub.f32 %v181, %v2652
    %v2654 = vand.u32 %v2653, 4294901760
    %2655 = vmatpush1.msra.mxu0 %v2654
    %v2656 = vand.u32 %v184, 4294901760
    %v2657 = vsub.f32 %v184, %v2656
    %v2658 = vand.u32 %v2657, 4294901760
    %2659 = vmatprep.subr.mxu0 %v2658
    %v2660 = vand.u32 %v183, 4294901760
    %v2661 = vsub.f32 %v183, %v2660
    %v2662 = vand.u32 %v2661, 4294901760
    %2663 = vmatpush1.msra.mxu0 %v2662
    %v2664 = vand.u32 %v186, 4294901760
    %v2665 = vsub.f32 %v186, %v2664
    %v2666 = vand.u32 %v2665, 4294901760
    %2667 = vmatprep.subr.mxu0 %v2666
    %v2668 = vand.u32 %v185, 4294901760
    %v2669 = vsub.f32 %v185, %v2668
    %v2670 = vand.u32 %v2669, 4294901760
    %2671 = vmatpush1.msra.mxu0 %v2670
    %v2672 = vand.u32 %v188, 4294901760
    %v2673 = vsub.f32 %v188, %v2672
    %v2674 = vand.u32 %v2673, 4294901760
    %2675 = vmatprep.subr.mxu0 %v2674
    %v2676 = vand.u32 %v187, 4294901760
    %v2677 = vsub.f32 %v187, %v2676
    %v2678 = vand.u32 %v2677, 4294901760
    %2679 = vmatpush1.msra.mxu0 %v2678
    %v2680 = vand.u32 %v190, 4294901760
    %v2681 = vsub.f32 %v190, %v2680
    %v2682 = vand.u32 %v2681, 4294901760
    %2683 = vmatprep.subr.mxu0 %v2682
    %v2684 = vand.u32 %v189, 4294901760
    %v2685 = vsub.f32 %v189, %v2684
    %v2686 = vand.u32 %v2685, 4294901760
    %2687 = vmatpush1.msra.mxu0 %v2686
    %v2688 = vand.u32 %v192, 4294901760
    %v2689 = vsub.f32 %v192, %v2688
    %v2690 = vand.u32 %v2689, 4294901760
    %2691 = vmatprep.subr.mxu0 %v2690
    %v2692 = vand.u32 %v191, 4294901760
    %v2693 = vsub.f32 %v191, %v2692
    %v2694 = vand.u32 %v2693, 4294901760
    %2695 = vmatpush1.msra.mxu0 %v2694
    %v2696 = vand.u32 %v1555, 4294901760
    %2697 = vmatprep.mubr.f32.mxu0 %v2696
    %v2698 = vand.u32 %v1554, 4294901760
    %2699 = vmatmul.mubr.f32.gmra.mrb[0].mxu0 %v2698
    %v2700 = vpop.f32.mrb[0].mxu0
    %v2701 = vadd.f32 %v2436, %v2700
    %v2702 = vpop.f32.mrb[0].mxu0
    %v2703 = vadd.f32 %v2438, %v2702
    %2704 = vdwg.mxu0
    %v2705 = vand.u32 %v130, 4294901760
    %2706 = vmatprep.subr.mxu0 %v2705
    %v2707 = vand.u32 %v129, 4294901760
    %2708 = vmatpush1.msra.mxu0 %v2707
    %v2709 = vand.u32 %v132, 4294901760
    %2710 = vmatprep.subr.mxu0 %v2709
    %v2711 = vand.u32 %v131, 4294901760
    %2712 = vmatpush1.msra.mxu0 %v2711
    %v2713 = vand.u32 %v134, 4294901760
    %2714 = vmatprep.subr.mxu0 %v2713
    %v2715 = vand.u32 %v133, 4294901760
    %2716 = vmatpush1.msra.mxu0 %v2715
    %v2717 = vand.u32 %v136, 4294901760
    %2718 = vmatprep.subr.mxu0 %v2717
    %v2719 = vand.u32 %v135, 4294901760
    %2720 = vmatpush1.msra.mxu0 %v2719
    %v2721 = vand.u32 %v138, 4294901760
    %2722 = vmatprep.subr.mxu0 %v2721
    %v2723 = vand.u32 %v137, 4294901760
    %2724 = vmatpush1.msra.mxu0 %v2723
    %v2725 = vand.u32 %v140, 4294901760
    %2726 = vmatprep.subr.mxu0 %v2725
    %v2727 = vand.u32 %v139, 4294901760
    %2728 = vmatpush1.msra.mxu0 %v2727
    %v2729 = vand.u32 %v142, 4294901760
    %2730 = vmatprep.subr.mxu0 %v2729
    %v2731 = vand.u32 %v141, 4294901760
    %2732 = vmatpush1.msra.mxu0 %v2731
    %v2733 = vand.u32 %v144, 4294901760
    %2734 = vmatprep.subr.mxu0 %v2733
    %v2735 = vand.u32 %v143, 4294901760
    %2736 = vmatpush1.msra.mxu0 %v2735
    %v2737 = vand.u32 %v146, 4294901760
    %2738 = vmatprep.subr.mxu0 %v2737
    %v2739 = vand.u32 %v145, 4294901760
    %2740 = vmatpush1.msra.mxu0 %v2739
    %v2741 = vand.u32 %v148, 4294901760
    %2742 = vmatprep.subr.mxu0 %v2741
    %v2743 = vand.u32 %v147, 4294901760
    %2744 = vmatpush1.msra.mxu0 %v2743
    %v2745 = vand.u32 %v150, 4294901760
    %2746 = vmatprep.subr.mxu0 %v2745
    %v2747 = vand.u32 %v149, 4294901760
    %2748 = vmatpush1.msra.mxu0 %v2747
    %v2749 = vand.u32 %v152, 4294901760
    %2750 = vmatprep.subr.mxu0 %v2749
    %v2751 = vand.u32 %v151, 4294901760
    %2752 = vmatpush1.msra.mxu0 %v2751
    %v2753 = vand.u32 %v154, 4294901760
    %2754 = vmatprep.subr.mxu0 %v2753
    %v2755 = vand.u32 %v153, 4294901760
    %2756 = vmatpush1.msra.mxu0 %v2755
    %v2757 = vand.u32 %v156, 4294901760
    %2758 = vmatprep.subr.mxu0 %v2757
    %v2759 = vand.u32 %v155, 4294901760
    %2760 = vmatpush1.msra.mxu0 %v2759
    %v2761 = vand.u32 %v158, 4294901760
    %2762 = vmatprep.subr.mxu0 %v2761
    %v2763 = vand.u32 %v157, 4294901760
    %2764 = vmatpush1.msra.mxu0 %v2763
    %v2765 = vand.u32 %v160, 4294901760
    %2766 = vmatprep.subr.mxu0 %v2765
    %v2767 = vand.u32 %v159, 4294901760
    %2768 = vmatpush1.msra.mxu0 %v2767
    %v2769 = vand.u32 %v162, 4294901760
    %2770 = vmatprep.subr.mxu0 %v2769
    %v2771 = vand.u32 %v161, 4294901760
    %2772 = vmatpush1.msra.mxu0 %v2771
    %v2773 = vand.u32 %v164, 4294901760
    %2774 = vmatprep.subr.mxu0 %v2773
    %v2775 = vand.u32 %v163, 4294901760
    %2776 = vmatpush1.msra.mxu0 %v2775
    %v2777 = vand.u32 %v166, 4294901760
    %2778 = vmatprep.subr.mxu0 %v2777
    %v2779 = vand.u32 %v165, 4294901760
    %2780 = vmatpush1.msra.mxu0 %v2779
    %v2781 = vand.u32 %v168, 4294901760
    %2782 = vmatprep.subr.mxu0 %v2781
    %v2783 = vand.u32 %v167, 4294901760
    %2784 = vmatpush1.msra.mxu0 %v2783
    %v2785 = vand.u32 %v170, 4294901760
    %2786 = vmatprep.subr.mxu0 %v2785
    %v2787 = vand.u32 %v169, 4294901760
    %2788 = vmatpush1.msra.mxu0 %v2787
    %v2789 = vand.u32 %v172, 4294901760
    %2790 = vmatprep.subr.mxu0 %v2789
    %v2791 = vand.u32 %v171, 4294901760
    %2792 = vmatpush1.msra.mxu0 %v2791
    %v2793 = vand.u32 %v174, 4294901760
    %2794 = vmatprep.subr.mxu0 %v2793
    %v2795 = vand.u32 %v173, 4294901760
    %2796 = vmatpush1.msra.mxu0 %v2795
    %v2797 = vand.u32 %v176, 4294901760
    %2798 = vmatprep.subr.mxu0 %v2797
    %v2799 = vand.u32 %v175, 4294901760
    %2800 = vmatpush1.msra.mxu0 %v2799
    %v2801 = vand.u32 %v178, 4294901760
    %2802 = vmatprep.subr.mxu0 %v2801
    %v2803 = vand.u32 %v177, 4294901760
    %2804 = vmatpush1.msra.mxu0 %v2803
    %v2805 = vand.u32 %v180, 4294901760
    %2806 = vmatprep.subr.mxu0 %v2805
    %v2807 = vand.u32 %v179, 4294901760
    %2808 = vmatpush1.msra.mxu0 %v2807
    %v2809 = vand.u32 %v182, 4294901760
    %2810 = vmatprep.subr.mxu0 %v2809
    %v2811 = vand.u32 %v181, 4294901760
    %2812 = vmatpush1.msra.mxu0 %v2811
    %v2813 = vand.u32 %v184, 4294901760
    %2814 = vmatprep.subr.mxu0 %v2813
    %v2815 = vand.u32 %v183, 4294901760
    %2816 = vmatpush1.msra.mxu0 %v2815
    %v2817 = vand.u32 %v186, 4294901760
    %2818 = vmatprep.subr.mxu0 %v2817
    %v2819 = vand.u32 %v185, 4294901760
    %2820 = vmatpush1.msra.mxu0 %v2819
    %v2821 = vand.u32 %v188, 4294901760
    %2822 = vmatprep.subr.mxu0 %v2821
    %v2823 = vand.u32 %v187, 4294901760
    %2824 = vmatpush1.msra.mxu0 %v2823
    %v2825 = vand.u32 %v190, 4294901760
    %2826 = vmatprep.subr.mxu0 %v2825
    %v2827 = vand.u32 %v189, 4294901760
    %2828 = vmatpush1.msra.mxu0 %v2827
    %v2829 = vand.u32 %v192, 4294901760
    %2830 = vmatprep.subr.mxu0 %v2829
    %v2831 = vand.u32 %v191, 4294901760
    %2832 = vmatpush1.msra.mxu0 %v2831
    %v2833 = vand.u32 %v1555, 4294901760
    %2834 = vmatprep.mubr.f32.mxu0 %v2833
    %v2835 = vand.u32 %v1554, 4294901760
    %2836 = vmatmul.mubr.f32.gmra.mrb[0].mxu0 %v2835
    %v2837 = vpop.f32.mrb[0].mxu0
    %v2838 = vadd.f32 %v2701, %v2837
    %v2839 = vpop.f32.mrb[0].mxu0
    %v2840 = vadd.f32 %v2703, %v2839
    %2841 = vdwg.mxu0
    %s2842 = sld [smem:[#allocation2]]
    %v2843 = vstv %s2842
    %v2844 = vadd.f32 %v2838, %v2843
    %v2845 = vadd.f32 %v2840, %v2843
    %v2846 = vxor.u32 %v2844, 2147483648
    %v2847 = vxor.u32 %v2845, 2147483648
    %v2848 = vmul.f32 %v2846, 1.442695
    %v2849 = vpow.pop %v2848
    %v2850 = vmul.f32 %v2847, 1.442695
    %v2851 = vpow.pop %v2850
    %v2852 = vadd.f32 %v2849, 1.0
    %v2853 = vadd.f32 %v2851, 1.0
    %v2854 = vrcp.pop %v2852
    %v2855 = vmul.f32 1.0, %v2854
    %v2856 = vrcp.pop %v2853
    %v2857 = vmul.f32 1.0, %v2856
    %v2860 = vcombine.low %v2855, %v2857
    %v2862 = vunpack.c.l.s4 1983009808
    %v2863 = vunpack.c.0.s8 %v2862
    %v2864 = vlaneseq
    %v2865 = vshrl.u32 %v2864, 7
    %v2866 = vsub.s32 %v2863, %v2865
    %v2867 = vrot.slane %v2860, %v2866
    %2869 = vst [vmem:[#allocation9] sm:$0xf] %v2867
    // Predicated region
    $region30: #{tpu_custom_call.1} parent=1 // pred_check
      _
    $region31: #{tpu_custom_call.1} parent=1 // pred_check_branch
      %2871 = sbr.rel (0) target = $region33
    $region32: #{tpu_custom_call.1} parent=1 // pred_region
      %s2873 = ssub.s32 64, 64
      %2874 = vsyncadd [#allocation5], %s2873
      %s2876 = sshll.u32 [#allocation9], 4
      %s2877 = int_to_ptr.vmem [resolvable:$true] %s2876
      %2879 = dma.vmem_to_hbm [thread:$0]  %s2877, 64, %s4, [#allocation5]
    $region33: #{tpu_custom_call.1} parent=1 // pred_fallthru
      _
    // Predicated region
    $region34: #{tpu_custom_call.1} parent=1 // pred_check
      _
    $region35: #{tpu_custom_call.1} parent=1 // pred_check_branch
      %2881 = sbr.rel (0) target = $region37
    $region36: #{tpu_custom_call.1} parent=1 // pred_region
      %2882 = dma.done [#allocation5], 64
    $region37: #{tpu_custom_call.1} parent=1 // pred_fallthru
      _
    %2883 = vsyncpa [#allocation4], 1
    %2884 = vsyncpa [#allocation7], 1
    %2885 = vsyncpa [#allocation5], 1

</llo_original>
